<compile_context>
chip_gen: v7x
topology: tpu7x:2x2x1
jax: 0.10.0
libtpu: 0.0.40
codegen_flags: <defaults>
</compile_context>

<pallas_src>
import functools

import numpy as np
import jax
import jax.numpy as jnp
from jax.experimental import pallas as pl
from jax.experimental.pallas import tpu as pltpu

VMEM_SPEC = pl.BlockSpec(memory_space=pltpu.MemorySpace.VMEM)
_LANES = 128
_INV_SQRT2 = 0.7071067811865475

CFG = dict(C=3, img=16, patch=8, hidden=32, heads=2, inter=64, layers=2,
           num_classes=8, batch=2)


# --------------------------- single fused kernel ------------------------------

def _ssl_fused_kernel(patches_ref, patch_w_ref, add_emb_ref, mask_ref,
                      ln1_g_ref, ln1_b_ref, qkv_w_ref, qkv_b_ref,
                      o_w_ref, o_b_ref, ln2_g_ref, ln2_b_ref,
                      fc1_w_ref, fc1_b_ref, fc2_w_ref, fc2_b_ref,
                      fln_g_ref, fln_b_ref, pool_w_ref, pool_b_ref,
                      cls_w1_ref, cls_w2_ref, cls_b_ref,
                      out_ref, *, layers, heads, dh, batch, hidden, eps):
    f32 = jnp.float32
    bf16 = jnp.bfloat16

    def mm(a, w):
        # MXU matmul: bf16 inputs, f32 accumulation.
        return jnp.dot(a.astype(bf16), w.astype(bf16), preferred_element_type=f32)

    def layernorm(x, g, b):
        mu = jnp.mean(x, axis=-1, keepdims=True)
        var = jnp.mean(jnp.square(x - mu), axis=-1, keepdims=True)
        return (x - mu) * jax.lax.rsqrt(var + eps) * g[None, :] + b[None, :]

    # ---- patch embedding + additive (CLS + positional) embedding -------------
    # Row layout: rows [0, 2B) are CLS tokens (zero patch rows -> just add_emb),
    # then 2B*n_patch patch rows, then zero pad rows to an 8-aligned row count.
    h = mm(patches_ref[...], patch_w_ref[...]) + add_emb_ref[...]
    mask = mask_ref[...]          # (R_pad, R_pad) additive block-diag batch mask

    # ---- pre-LN transformer encoder, fully unrolled (L=2) --------------------
    for l in range(layers):
        x = layernorm(h, ln1_g_ref[l], ln1_b_ref[l])
        qkv = mm(x, qkv_w_ref[l]) + qkv_b_ref[l][None, :]             # (R, 3H)
        q = qkv[:, 0:hidden]                       # 1/sqrt(dh) folded at pack time
        k = qkv[:, hidden:2 * hidden]
        v = qkv[:, 2 * hidden:3 * hidden]

        attn_out = o_b_ref[l][None, :]
        for hh in range(heads):
            lo, hi = hh * dh, (hh + 1) * dh
            s = jax.lax.dot_general(                                   # (R, R)
                q[:, lo:hi].astype(bf16), k[:, lo:hi].astype(bf16),
                (((1,), (1,)), ((), ())), preferred_element_type=f32)
            s = s + mask
            m = jnp.max(s, axis=-1, keepdims=True)
            p = jnp.exp(s - m)
            p = p * pl.reciprocal(jnp.sum(p, axis=-1, keepdims=True), approx=True)
            ctx = mm(p, v[:, lo:hi])                                   # (R, dh)
            attn_out = attn_out + mm(ctx, o_w_ref[l][lo:hi, :])        # accumulate
        h = h + attn_out

        x = layernorm(h, ln2_g_ref[l], ln2_b_ref[l])
        mid = mm(x, fc1_w_ref[l]) + fc1_b_ref[l][None, :]
        mid = 0.5 * mid * (1.0 + jax.lax.erf(mid * _INV_SQRT2))        # exact GELU
        h = h + mm(mid, fc2_w_ref[l]) + fc2_b_ref[l][None, :]

    # ---- final LayerNorm + pooler tanh(dense(CLS)) + fused classifier --------
    seq = layernorm(h, fln_g_ref[0], fln_b_ref[0])
    cls_tok = seq[0:2 * batch, :]                                      # (2B, H)
    pooled = jnp.tanh(mm(cls_tok, pool_w_ref[...]) + pool_b_ref[0, :][None, :])
    feat1 = pooled[0:batch, :]                                         # image 1
    feat2 = pooled[batch:2 * batch, :]                                 # image 2
    logits = (mm(feat1, cls_w1_ref[...]) + mm(feat2, cls_w2_ref[...])
              + cls_b_ref[0, :][None, :])
    out_ref[...] = logits                                              # (B, 128)


# ----------------------------- parameter handling ----------------------------

def init_params(key, cfg):
    C, p, H = cfg["C"], cfg["patch"], cfg["hidden"]
    inter, L, nc = cfg["inter"], cfg["layers"], cfg["num_classes"]
    n_patch = (cfg["img"] // p) ** 2
    keys = iter(jax.random.split(key, 128))

    def w(shape):
        return 0.02 * jax.random.normal(next(keys), shape, jnp.float32)

    def zeros(n):
        return jnp.zeros((n,), jnp.float32)

    params = {
        "patch_w": w((C * p * p, H)), "patch_b": zeros(H),
        "cls": w((1, 1, H)),
        "pos": w((1, n_patch + 1, H)),
        "layers": [],
        "final_ln_g": jnp.ones((H,), jnp.float32), "final_ln_b": zeros(H),
        "pool_w": w((H, H)), "pool_b": zeros(H),
        "cls_w": w((2 * H, nc)), "cls_b": zeros(nc),
    }
    for _ in range(L):
        params["layers"].append({
            "ln1_g": jnp.ones((H,), jnp.float32), "ln1_b": zeros(H),
            "q_w": w((H, H)), "q_b": zeros(H),
            "k_w": w((H, H)), "k_b": zeros(H),
            "v_w": w((H, H)), "v_b": zeros(H),
            "o_w": w((H, H)), "o_b": zeros(H),
            "ln2_g": jnp.ones((H,), jnp.float32), "ln2_b": zeros(H),
            "fc1_w": w((H, inter)), "fc1_b": zeros(inter),
            "fc2_w": w((inter, H)), "fc2_b": zeros(H),
        })
    return params


def pack_params(params, cfg):
    """Stack per-layer weights, fuse QKV (with folded 1/sqrt(dh)), bf16 matmul
    weights, precompute the additive row embedding + block-diag mask, split &
    lane-pad the classifier head."""
    H, nc, B = cfg["hidden"], cfg["num_classes"], cfg["batch"]
    heads, L = cfg["heads"], cfg["layers"]
    C, p, img = cfg["C"], cfg["patch"], cfg["img"]
    n_patch = (img // p) ** 2
    dh = H // heads
    two_b = 2 * B
    R = two_b * (n_patch + 1)
    R_pad = ((R + 7) // 8) * 8
    scale = 1.0 / (dh ** 0.5)
    bf16 = jnp.bfloat16
    lys = params["layers"]

    # additive per-row embedding: CLS rows get cls+pos[0]; patch rows pos[1+i]+patch_b
    cls_row = (params["cls"][0, 0, :] + params["pos"][0, 0, :])[None, :]     # (1, H)
    patch_rows = params["pos"][0, 1:, :] + params["patch_b"][None, :]        # (n_patch, H)
    add_emb = jnp.concatenate(
        [jnp.broadcast_to(cls_row, (two_b, H)),
         jnp.tile(patch_rows, (two_b, 1)),
         jnp.zeros((R_pad - R, H), jnp.float32)], axis=0)

    # additive block-diagonal batch mask; pad rows only attend to themselves
    row_id = np.concatenate([np.arange(two_b),
                             np.repeat(np.arange(two_b), n_patch),
                             two_b + np.arange(R_pad - R)])
    mask = np.where(row_id[:, None] == row_id[None, :], 0.0, -1e30).astype(np.float32)

    return {
        "patch_w": params["patch_w"].astype(bf16),
        "add_emb": add_emb,
        "mask": jnp.asarray(mask),
        "ln1_g": jnp.stack([l["ln1_g"] for l in lys]),
        "ln1_b": jnp.stack([l["ln1_b"] for l in lys]),
        # 1/sqrt(dh) folded into the Q slice of the fused QKV weights & bias
        "qkv_w": jnp.stack([jnp.concatenate(
            [l["q_w"] * scale, l["k_w"], l["v_w"]], axis=1) for l in lys]).astype(bf16),
        "qkv_b": jnp.stack([jnp.concatenate(
            [l["q_b"] * scale, l["k_b"], l["v_b"]]) for l in lys]),
        "o_w": jnp.stack([l["o_w"] for l in lys]).astype(bf16),
        "o_b": jnp.stack([l["o_b"] for l in lys]),
        "ln2_g": jnp.stack([l["ln2_g"] for l in lys]),
        "ln2_b": jnp.stack([l["ln2_b"] for l in lys]),
        "fc1_w": jnp.stack([l["fc1_w"] for l in lys]).astype(bf16),
        "fc1_b": jnp.stack([l["fc1_b"] for l in lys]),
        "fc2_w": jnp.stack([l["fc2_w"] for l in lys]).astype(bf16),
        "fc2_b": jnp.stack([l["fc2_b"] for l in lys]),
        "fln_g": params["final_ln_g"].reshape(1, -1),
        "fln_b": params["final_ln_b"].reshape(1, -1),
        "pool_w": params["pool_w"].astype(bf16),
        "pool_b": params["pool_b"].reshape(1, -1),
        # classifier split (no lane concat in-kernel), classes zero-padded to 128 lanes
        "cls_w1_pad": jnp.zeros((H, _LANES), jnp.float32)
                         .at[:, :nc].set(params["cls_w"][:H, :]).astype(bf16),
        "cls_w2_pad": jnp.zeros((H, _LANES), jnp.float32)
                         .at[:, :nc].set(params["cls_w"][H:, :]).astype(bf16),
        "cls_b_pad": jnp.zeros((1, _LANES), jnp.float32).at[0, :nc].set(params["cls_b"]),
    }


# --------------------------------- forward -----------------------------------

def ssl_visual_classifier(packed, x1, x2, cfg):
    C, p, H = cfg["C"], cfg["patch"], cfg["hidden"]
    heads, L, nc = cfg["heads"], cfg["layers"], cfg["num_classes"]
    inter = cfg["inter"]
    B, img = x1.shape[0], x1.shape[2]
    gh = gw = img // p
    n_patch = gh * gw
    dh = H // heads
    two_b = 2 * B
    R = two_b * (n_patch + 1)
    R_pad = ((R + 7) // 8) * 8
    pdim = C * p * p

    # glue: flatten (C, ph, pw) patches for BOTH images as one 2B batch; prepend
    # 2B zero rows (CLS slots) and append pad rows so the row count is 8-aligned.
    x = jnp.concatenate([x1, x2], axis=0)                      # (2B, C, img, img)
    patches = x.reshape(two_b, C, gh, p, gw, p).transpose(0, 2, 4, 1, 3, 5)
    patches = patches.reshape(two_b * n_patch, pdim)
    patches_pad = jnp.pad(patches, ((two_b, R_pad - R), (0, 0)))

    # advisory cost estimate: this kernel is latency-floor-bound, flops are tiny
    flops = (2 * R_pad * pdim * H
             + L * (2 * R_pad * H * 3 * H + 4 * heads * R_pad * R_pad * dh
                    + 2 * R_pad * H * H + 4 * R_pad * H * inter)
             + 2 * two_b * H * H + 4 * B * H * _LANES)
    transcendentals = L * (heads * R_pad * R_pad + R_pad * inter + 2 * R_pad) + two_b * H
    bytes_accessed = 4 * (patches_pad.size + R_pad * H + R_pad * R_pad
                          + L * (8 * H + 4 * H * H + 2 * H * inter + 3 * H + inter)
                          + 2 * H + H * H + H + 2 * H * _LANES + _LANES + B * _LANES)

    logits_pad = pl.pallas_call(
        functools.partial(_ssl_fused_kernel, layers=L, heads=heads, dh=dh,
                          batch=B, hidden=H, eps=1e-12),
        out_shape=jax.ShapeDtypeStruct((B, _LANES), jnp.float32),
        in_specs=[VMEM_SPEC] * 23,
        out_specs=VMEM_SPEC,
        cost_estimate=pl.CostEstimate(flops=flops, transcendentals=transcendentals,
                                      bytes_accessed=bytes_accessed),
    )(patches_pad, packed["patch_w"], packed["add_emb"], packed["mask"],
      packed["ln1_g"], packed["ln1_b"], packed["qkv_w"], packed["qkv_b"],
      packed["o_w"], packed["o_b"], packed["ln2_g"], packed["ln2_b"],
      packed["fc1_w"], packed["fc1_b"], packed["fc2_w"], packed["fc2_b"],
      packed["fln_g"], packed["fln_b"], packed["pool_w"], packed["pool_b"],
      packed["cls_w1_pad"], packed["cls_w2_pad"], packed["cls_b_pad"])

    return logits_pad[:, :nc]


# ----------------------------------- main -------------------------------------

if __name__ == "__main__":
    key = jax.random.PRNGKey(0)
    kp, k1, k2 = jax.random.split(key, 3)
    params = init_params(kp, CFG)
    packed = pack_params(params, CFG)

    B = CFG["batch"]
    x1 = jax.random.normal(k1, (B, CFG["C"], CFG["img"], CFG["img"]), jnp.float32)
    x2 = jax.random.normal(k2, (B, CFG["C"], CFG["img"], CFG["img"]), jnp.float32)

    forward = jax.jit(functools.partial(ssl_visual_classifier, cfg=CFG))
    logits = forward(packed, x1, x2)                  # (B, num_classes)
    jax.block_until_ready(logits)
    assert logits.shape == (B, CFG["num_classes"])
    print("KERNEL_OK")
</pallas_src>

<mosaic_0001>
module attributes {stable_mosaic.version = 11 : i64} {
  func.func @_ssl_fused_kernel(%arg0: memref<24x192xf32, #tpu.memory_space<vmem>>, %arg1: memref<192x32xbf16, #tpu.memory_space<vmem>>, %arg2: memref<24x32xf32, #tpu.memory_space<vmem>>, %arg3: memref<24x24xf32, #tpu.memory_space<vmem>>, %arg4: memref<2x32xf32, #tpu.memory_space<vmem>>, %arg5: memref<2x32xf32, #tpu.memory_space<vmem>>, %arg6: memref<2x32x96xbf16, #tpu.memory_space<vmem>>, %arg7: memref<2x96xf32, #tpu.memory_space<vmem>>, %arg8: memref<2x32x32xbf16, #tpu.memory_space<vmem>>, %arg9: memref<2x32xf32, #tpu.memory_space<vmem>>, %arg10: memref<2x32xf32, #tpu.memory_space<vmem>>, %arg11: memref<2x32xf32, #tpu.memory_space<vmem>>, %arg12: memref<2x32x64xbf16, #tpu.memory_space<vmem>>, %arg13: memref<2x64xf32, #tpu.memory_space<vmem>>, %arg14: memref<2x64x32xbf16, #tpu.memory_space<vmem>>, %arg15: memref<2x32xf32, #tpu.memory_space<vmem>>, %arg16: memref<1x32xf32, #tpu.memory_space<vmem>>, %arg17: memref<1x32xf32, #tpu.memory_space<vmem>>, %arg18: memref<32x32xbf16, #tpu.memory_space<vmem>>, %arg19: memref<1x32xf32, #tpu.memory_space<vmem>>, %arg20: memref<32x128xbf16, #tpu.memory_space<vmem>>, %arg21: memref<32x128xbf16, #tpu.memory_space<vmem>>, %arg22: memref<1x128xf32, #tpu.memory_space<vmem>>, %arg23: memref<2x128xf32, #tpu.memory_space<vmem>>) attributes {dimension_semantics = [], scalar_prefetch = 0 : i64, scratch_operands = 0 : i64, tpu.core_type = #tpu.core_type<tc>} {
    %c0 = arith.constant 0 : index
    %c0_0 = arith.constant 0 : index
    %0 = vector.load %arg0[%c0, %c0_0] : memref<24x192xf32, #tpu.memory_space<vmem>>, vector<24x192xf32>
    %c0_1 = arith.constant 0 : index
    %c0_2 = arith.constant 0 : index
    %1 = vector.load %arg1[%c0_1, %c0_2] : memref<192x32xbf16, #tpu.memory_space<vmem>>, vector<192x32xbf16>
    %2 = arith.truncf %0 : vector<24x192xf32> to vector<24x192xbf16>
    %cst = arith.constant dense<0.000000e+00> : vector<24x32xf32>
    %3 = tpu.matmul %2, %1, %cst {dimension_numbers = #tpu.dot_dimension_numbers<[1], [0], [0], [1], [0, 0, 1, 1], [], []>} : vector<24x192xbf16>, vector<192x32xbf16>, vector<24x32xf32> -> vector<24x32xf32>
    %c0_3 = arith.constant 0 : index
    %c0_4 = arith.constant 0 : index
    %4 = vector.load %arg2[%c0_3, %c0_4] : memref<24x32xf32, #tpu.memory_space<vmem>>, vector<24x32xf32>
    %5 = arith.addf %3, %4 : vector<24x32xf32>
    %c0_5 = arith.constant 0 : index
    %c0_6 = arith.constant 0 : index
    %6 = vector.load %arg3[%c0_5, %c0_6] : memref<24x24xf32, #tpu.memory_space<vmem>>, vector<24x24xf32>
    %c0_7 = arith.constant 0 : index
    %c0_8 = arith.constant 0 : index
    %7 = vector.load %arg4[%c0_7, %c0_8] : memref<2x32xf32, #tpu.memory_space<vmem>>, vector<1x32xf32>
    %8 = vector.shape_cast %7 : vector<1x32xf32> to vector<32xf32>
    %c0_9 = arith.constant 0 : index
    %c0_10 = arith.constant 0 : index
    %9 = vector.load %arg5[%c0_9, %c0_10] : memref<2x32xf32, #tpu.memory_space<vmem>>, vector<1x32xf32>
    %10 = vector.shape_cast %9 : vector<1x32xf32> to vector<32xf32>
    %cst_11 = arith.constant dense<0.000000e+00> : vector<24xf32>
    %11 = vector.multi_reduction <add>, %5, %cst_11 [1] : vector<24x32xf32> to vector<24xf32>
    %12 = vector.shape_cast %11 : vector<24xf32> to vector<24x1xf32>
    %cst_12 = arith.constant 3.200000e+01 : f32
    %13 = vector.broadcast %cst_12 : f32 to vector<24x1xf32>
    %14 = arith.divf %12, %13 : vector<24x1xf32>
    %15 = vector.broadcast %14 : vector<24x1xf32> to vector<24x32xf32>
    %16 = arith.subf %5, %15 : vector<24x32xf32>
    %17 = arith.mulf %16, %16 : vector<24x32xf32>
    %cst_13 = arith.constant dense<0.000000e+00> : vector<24xf32>
    %18 = vector.multi_reduction <add>, %17, %cst_13 [1] : vector<24x32xf32> to vector<24xf32>
    %19 = vector.shape_cast %18 : vector<24xf32> to vector<24x1xf32>
    %cst_14 = arith.constant 3.200000e+01 : f32
    %20 = vector.broadcast %cst_14 : f32 to vector<24x1xf32>
    %21 = arith.divf %19, %20 : vector<24x1xf32>
    %22 = vector.broadcast %14 : vector<24x1xf32> to vector<24x32xf32>
    %23 = arith.subf %5, %22 : vector<24x32xf32>
    %cst_15 = arith.constant 9.99999996E-13 : f32
    %24 = vector.broadcast %cst_15 : f32 to vector<24x1xf32>
    %25 = arith.addf %21, %24 : vector<24x1xf32>
    %26 = math.rsqrt %25 : vector<24x1xf32>
    %27 = vector.broadcast %26 : vector<24x1xf32> to vector<24x32xf32>
    %28 = arith.mulf %23, %27 : vector<24x32xf32>
    %29 = vector.shape_cast %8 : vector<32xf32> to vector<1x32xf32>
    %30 = vector.broadcast %29 : vector<1x32xf32> to vector<24x32xf32>
    %31 = arith.mulf %28, %30 : vector<24x32xf32>
    %32 = vector.shape_cast %10 : vector<32xf32> to vector<1x32xf32>
    %33 = vector.broadcast %32 : vector<1x32xf32> to vector<24x32xf32>
    %34 = arith.addf %31, %33 : vector<24x32xf32>
    %c0_16 = arith.constant 0 : index
    %c0_17 = arith.constant 0 : index
    %c0_18 = arith.constant 0 : index
    %35 = vector.load %arg6[%c0_16, %c0_17, %c0_18] : memref<2x32x96xbf16, #tpu.memory_space<vmem>>, vector<1x32x96xbf16>
    %36 = vector.shape_cast %35 : vector<1x32x96xbf16> to vector<32x96xbf16>
    %37 = arith.truncf %34 : vector<24x32xf32> to vector<24x32xbf16>
    %cst_19 = arith.constant dense<0.000000e+00> : vector<24x96xf32>
    %38 = tpu.matmul %37, %36, %cst_19 {dimension_numbers = #tpu.dot_dimension_numbers<[1], [0], [0], [1], [0, 0, 1, 1], [], []>} : vector<24x32xbf16>, vector<32x96xbf16>, vector<24x96xf32> -> vector<24x96xf32>
    %c0_20 = arith.constant 0 : index
    %c0_21 = arith.constant 0 : index
    %39 = vector.load %arg7[%c0_20, %c0_21] : memref<2x96xf32, #tpu.memory_space<vmem>>, vector<1x96xf32>
    %40 = vector.shape_cast %39 : vector<1x96xf32> to vector<96xf32>
    %41 = vector.shape_cast %40 : vector<96xf32> to vector<1x96xf32>
    %42 = vector.broadcast %41 : vector<1x96xf32> to vector<24x96xf32>
    %43 = arith.addf %38, %42 : vector<24x96xf32>
    %44 = vector.extract_strided_slice %43 {offsets = [0, 0], sizes = [24, 32], strides = [1, 1]} : vector<24x96xf32> to vector<24x32xf32>
    %45 = vector.extract_strided_slice %43 {offsets = [0, 32], sizes = [24, 32], strides = [1, 1]} : vector<24x96xf32> to vector<24x32xf32>
    %46 = vector.extract_strided_slice %43 {offsets = [0, 64], sizes = [24, 32], strides = [1, 1]} : vector<24x96xf32> to vector<24x32xf32>
    %c0_22 = arith.constant 0 : index
    %c0_23 = arith.constant 0 : index
    %47 = vector.load %arg9[%c0_22, %c0_23] : memref<2x32xf32, #tpu.memory_space<vmem>>, vector<1x32xf32>
    %48 = vector.shape_cast %47 : vector<1x32xf32> to vector<32xf32>
    %49 = vector.shape_cast %48 : vector<32xf32> to vector<1x32xf32>
    %50 = vector.extract_strided_slice %44 {offsets = [0, 0], sizes = [24, 16], strides = [1, 1]} : vector<24x32xf32> to vector<24x16xf32>
    %51 = arith.truncf %50 : vector<24x16xf32> to vector<24x16xbf16>
    %52 = vector.extract_strided_slice %45 {offsets = [0, 0], sizes = [24, 16], strides = [1, 1]} : vector<24x32xf32> to vector<24x16xf32>
    %53 = arith.truncf %52 : vector<24x16xf32> to vector<24x16xbf16>
    %cst_24 = arith.constant dense<0.000000e+00> : vector<24x24xf32>
    %54 = tpu.matmul %51, %53, %cst_24 {dimension_numbers = #tpu.dot_dimension_numbers<[1], [1], [0], [0], [0, 0, 1, 0], [], []>} : vector<24x16xbf16>, vector<24x16xbf16>, vector<24x24xf32> -> vector<24x24xf32>
    %55 = arith.addf %54, %6 : vector<24x24xf32>
    %cst_25 = arith.constant dense<0xFF800000> : vector<24xf32>
    %56 = vector.multi_reduction <maximumf>, %55, %cst_25 [1] : vector<24x24xf32> to vector<24xf32>
    %57 = vector.shape_cast %56 : vector<24xf32> to vector<24x1xf32>
    %58 = vector.broadcast %57 : vector<24x1xf32> to vector<24x24xf32>
    %59 = arith.subf %55, %58 : vector<24x24xf32>
    %60 = math.exp %59 : vector<24x24xf32>
    %cst_26 = arith.constant dense<0.000000e+00> : vector<24xf32>
    %61 = vector.multi_reduction <add>, %60, %cst_26 [1] : vector<24x24xf32> to vector<24xf32>
    %62 = vector.shape_cast %61 : vector<24xf32> to vector<24x1xf32>
    %63 = tpu.reciprocal %62 {approx = true} : vector<24x1xf32> -> vector<24x1xf32>
    %64 = vector.broadcast %63 : vector<24x1xf32> to vector<24x24xf32>
    %65 = arith.mulf %60, %64 : vector<24x24xf32>
    %66 = vector.extract_strided_slice %46 {offsets = [0, 0], sizes = [24, 16], strides = [1, 1]} : vector<24x32xf32> to vector<24x16xf32>
    %67 = arith.truncf %65 : vector<24x24xf32> to vector<24x24xbf16>
    %68 = arith.truncf %66 : vector<24x16xf32> to vector<24x16xbf16>
    %cst_27 = arith.constant dense<0.000000e+00> : vector<24x16xf32>
    %69 = tpu.matmul %67, %68, %cst_27 {dimension_numbers = #tpu.dot_dimension_numbers<[1], [0], [0], [1], [0, 0, 1, 1], [], []>} : vector<24x24xbf16>, vector<24x16xbf16>, vector<24x16xf32> -> vector<24x16xf32>
    %c0_28 = arith.constant 0 : index
    %c0_29 = arith.constant 0 : index
    %c0_30 = arith.constant 0 : index
    %70 = vector.load %arg8[%c0_28, %c0_29, %c0_30] : memref<2x32x32xbf16, #tpu.memory_space<vmem>>, vector<1x32x32xbf16>
    %71 = vector.shape_cast %70 : vector<1x32x32xbf16> to vector<32x32xbf16>
    %72 = vector.extract_strided_slice %71 {offsets = [0, 0], sizes = [16, 32], strides = [1, 1]} : vector<32x32xbf16> to vector<16x32xbf16>
    %73 = arith.truncf %69 : vector<24x16xf32> to vector<24x16xbf16>
    %cst_31 = arith.constant dense<0.000000e+00> : vector<24x32xf32>
    %74 = tpu.matmul %73, %72, %cst_31 {dimension_numbers = #tpu.dot_dimension_numbers<[1], [0], [0], [1], [0, 0, 1, 1], [], []>} : vector<24x16xbf16>, vector<16x32xbf16>, vector<24x32xf32> -> vector<24x32xf32>
    %75 = vector.broadcast %49 : vector<1x32xf32> to vector<24x32xf32>
    %76 = arith.addf %75, %74 : vector<24x32xf32>
    %77 = vector.extract_strided_slice %44 {offsets = [0, 16], sizes = [24, 16], strides = [1, 1]} : vector<24x32xf32> to vector<24x16xf32>
    %78 = arith.truncf %77 : vector<24x16xf32> to vector<24x16xbf16>
    %79 = vector.extract_strided_slice %45 {offsets = [0, 16], sizes = [24, 16], strides = [1, 1]} : vector<24x32xf32> to vector<24x16xf32>
    %80 = arith.truncf %79 : vector<24x16xf32> to vector<24x16xbf16>
    %cst_32 = arith.constant dense<0.000000e+00> : vector<24x24xf32>
    %81 = tpu.matmul %78, %80, %cst_32 {dimension_numbers = #tpu.dot_dimension_numbers<[1], [1], [0], [0], [0, 0, 1, 0], [], []>} : vector<24x16xbf16>, vector<24x16xbf16>, vector<24x24xf32> -> vector<24x24xf32>
    %82 = arith.addf %81, %6 : vector<24x24xf32>
    %cst_33 = arith.constant dense<0xFF800000> : vector<24xf32>
    %83 = vector.multi_reduction <maximumf>, %82, %cst_33 [1] : vector<24x24xf32> to vector<24xf32>
    %84 = vector.shape_cast %83 : vector<24xf32> to vector<24x1xf32>
    %85 = vector.broadcast %84 : vector<24x1xf32> to vector<24x24xf32>
    %86 = arith.subf %82, %85 : vector<24x24xf32>
    %87 = math.exp %86 : vector<24x24xf32>
    %cst_34 = arith.constant dense<0.000000e+00> : vector<24xf32>
    %88 = vector.multi_reduction <add>, %87, %cst_34 [1] : vector<24x24xf32> to vector<24xf32>
    %89 = vector.shape_cast %88 : vector<24xf32> to vector<24x1xf32>
    %90 = tpu.reciprocal %89 {approx = true} : vector<24x1xf32> -> vector<24x1xf32>
    %91 = vector.broadcast %90 : vector<24x1xf32> to vector<24x24xf32>
    %92 = arith.mulf %87, %91 : vector<24x24xf32>
    %93 = vector.extract_strided_slice %46 {offsets = [0, 16], sizes = [24, 16], strides = [1, 1]} : vector<24x32xf32> to vector<24x16xf32>
    %94 = arith.truncf %92 : vector<24x24xf32> to vector<24x24xbf16>
    %95 = arith.truncf %93 : vector<24x16xf32> to vector<24x16xbf16>
    %cst_35 = arith.constant dense<0.000000e+00> : vector<24x16xf32>
    %96 = tpu.matmul %94, %95, %cst_35 {dimension_numbers = #tpu.dot_dimension_numbers<[1], [0], [0], [1], [0, 0, 1, 1], [], []>} : vector<24x24xbf16>, vector<24x16xbf16>, vector<24x16xf32> -> vector<24x16xf32>
    %c0_36 = arith.constant 0 : index
    %c0_37 = arith.constant 0 : index
    %c0_38 = arith.constant 0 : index
    %97 = vector.load %arg8[%c0_36, %c0_37, %c0_38] : memref<2x32x32xbf16, #tpu.memory_space<vmem>>, vector<1x32x32xbf16>
    %98 = vector.shape_cast %97 : vector<1x32x32xbf16> to vector<32x32xbf16>
    %99 = vector.extract_strided_slice %98 {offsets = [16, 0], sizes = [16, 32], strides = [1, 1]} : vector<32x32xbf16> to vector<16x32xbf16>
    %100 = arith.truncf %96 : vector<24x16xf32> to vector<24x16xbf16>
    %cst_39 = arith.constant dense<0.000000e+00> : vector<24x32xf32>
    %101 = tpu.matmul %100, %99, %cst_39 {dimension_numbers = #tpu.dot_dimension_numbers<[1], [0], [0], [1], [0, 0, 1, 1], [], []>} : vector<24x16xbf16>, vector<16x32xbf16>, vector<24x32xf32> -> vector<24x32xf32>
    %102 = arith.addf %76, %101 : vector<24x32xf32>
    %103 = arith.addf %5, %102 : vector<24x32xf32>
    %c0_40 = arith.constant 0 : index
    %c0_41 = arith.constant 0 : index
    %104 = vector.load %arg10[%c0_40, %c0_41] : memref<2x32xf32, #tpu.memory_space<vmem>>, vector<1x32xf32>
    %105 = vector.shape_cast %104 : vector<1x32xf32> to vector<32xf32>
    %c0_42 = arith.constant 0 : index
    %c0_43 = arith.constant 0 : index
    %106 = vector.load %arg11[%c0_42, %c0_43] : memref<2x32xf32, #tpu.memory_space<vmem>>, vector<1x32xf32>
    %107 = vector.shape_cast %106 : vector<1x32xf32> to vector<32xf32>
    %cst_44 = arith.constant dense<0.000000e+00> : vector<24xf32>
    %108 = vector.multi_reduction <add>, %103, %cst_44 [1] : vector<24x32xf32> to vector<24xf32>
    %109 = vector.shape_cast %108 : vector<24xf32> to vector<24x1xf32>
    %cst_45 = arith.constant 3.200000e+01 : f32
    %110 = vector.broadcast %cst_45 : f32 to vector<24x1xf32>
    %111 = arith.divf %109, %110 : vector<24x1xf32>
    %112 = vector.broadcast %111 : vector<24x1xf32> to vector<24x32xf32>
    %113 = arith.subf %103, %112 : vector<24x32xf32>
    %114 = arith.mulf %113, %113 : vector<24x32xf32>
    %cst_46 = arith.constant dense<0.000000e+00> : vector<24xf32>
    %115 = vector.multi_reduction <add>, %114, %cst_46 [1] : vector<24x32xf32> to vector<24xf32>
    %116 = vector.shape_cast %115 : vector<24xf32> to vector<24x1xf32>
    %cst_47 = arith.constant 3.200000e+01 : f32
    %117 = vector.broadcast %cst_47 : f32 to vector<24x1xf32>
    %118 = arith.divf %116, %117 : vector<24x1xf32>
    %119 = vector.broadcast %111 : vector<24x1xf32> to vector<24x32xf32>
    %120 = arith.subf %103, %119 : vector<24x32xf32>
    %cst_48 = arith.constant 9.99999996E-13 : f32
    %121 = vector.broadcast %cst_48 : f32 to vector<24x1xf32>
    %122 = arith.addf %118, %121 : vector<24x1xf32>
    %123 = math.rsqrt %122 : vector<24x1xf32>
    %124 = vector.broadcast %123 : vector<24x1xf32> to vector<24x32xf32>
    %125 = arith.mulf %120, %124 : vector<24x32xf32>
    %126 = vector.shape_cast %105 : vector<32xf32> to vector<1x32xf32>
    %127 = vector.broadcast %126 : vector<1x32xf32> to vector<24x32xf32>
    %128 = arith.mulf %125, %127 : vector<24x32xf32>
    %129 = vector.shape_cast %107 : vector<32xf32> to vector<1x32xf32>
    %130 = vector.broadcast %129 : vector<1x32xf32> to vector<24x32xf32>
    %131 = arith.addf %128, %130 : vector<24x32xf32>
    %c0_49 = arith.constant 0 : index
    %c0_50 = arith.constant 0 : index
    %c0_51 = arith.constant 0 : index
    %132 = vector.load %arg12[%c0_49, %c0_50, %c0_51] : memref<2x32x64xbf16, #tpu.memory_space<vmem>>, vector<1x32x64xbf16>
    %133 = vector.shape_cast %132 : vector<1x32x64xbf16> to vector<32x64xbf16>
    %134 = arith.truncf %131 : vector<24x32xf32> to vector<24x32xbf16>
    %cst_52 = arith.constant dense<0.000000e+00> : vector<24x64xf32>
    %135 = tpu.matmul %134, %133, %cst_52 {dimension_numbers = #tpu.dot_dimension_numbers<[1], [0], [0], [1], [0, 0, 1, 1], [], []>} : vector<24x32xbf16>, vector<32x64xbf16>, vector<24x64xf32> -> vector<24x64xf32>
    %c0_53 = arith.constant 0 : index
    %c0_54 = arith.constant 0 : index
    %136 = vector.load %arg13[%c0_53, %c0_54] : memref<2x64xf32, #tpu.memory_space<vmem>>, vector<1x64xf32>
    %137 = vector.shape_cast %136 : vector<1x64xf32> to vector<64xf32>
    %138 = vector.shape_cast %137 : vector<64xf32> to vector<1x64xf32>
    %139 = vector.broadcast %138 : vector<1x64xf32> to vector<24x64xf32>
    %140 = arith.addf %135, %139 : vector<24x64xf32>
    %cst_55 = arith.constant 5.000000e-01 : f32
    %141 = vector.broadcast %cst_55 : f32 to vector<24x64xf32>
    %142 = arith.mulf %141, %140 : vector<24x64xf32>
    %cst_56 = arith.constant 0.707106769 : f32
    %143 = vector.broadcast %cst_56 : f32 to vector<24x64xf32>
    %144 = arith.mulf %140, %143 : vector<24x64xf32>
    %145 = math.erf %144 : vector<24x64xf32>
    %cst_57 = arith.constant 1.000000e+00 : f32
    %146 = vector.broadcast %cst_57 : f32 to vector<24x64xf32>
    %147 = arith.addf %146, %145 : vector<24x64xf32>
    %148 = arith.mulf %142, %147 : vector<24x64xf32>
    %c0_58 = arith.constant 0 : index
    %c0_59 = arith.constant 0 : index
    %c0_60 = arith.constant 0 : index
    %149 = vector.load %arg14[%c0_58, %c0_59, %c0_60] : memref<2x64x32xbf16, #tpu.memory_space<vmem>>, vector<1x64x32xbf16>
    %150 = vector.shape_cast %149 : vector<1x64x32xbf16> to vector<64x32xbf16>
    %151 = arith.truncf %148 : vector<24x64xf32> to vector<24x64xbf16>
    %cst_61 = arith.constant dense<0.000000e+00> : vector<24x32xf32>
    %152 = tpu.matmul %151, %150, %cst_61 {dimension_numbers = #tpu.dot_dimension_numbers<[1], [0], [0], [1], [0, 0, 1, 1], [], []>} : vector<24x64xbf16>, vector<64x32xbf16>, vector<24x32xf32> -> vector<24x32xf32>
    %153 = arith.addf %103, %152 : vector<24x32xf32>
    %c0_62 = arith.constant 0 : index
    %c0_63 = arith.constant 0 : index
    %154 = vector.load %arg15[%c0_62, %c0_63] : memref<2x32xf32, #tpu.memory_space<vmem>>, vector<1x32xf32>
    %155 = vector.shape_cast %154 : vector<1x32xf32> to vector<32xf32>
    %156 = vector.shape_cast %155 : vector<32xf32> to vector<1x32xf32>
    %157 = vector.broadcast %156 : vector<1x32xf32> to vector<24x32xf32>
    %158 = arith.addf %153, %157 : vector<24x32xf32>
    %c1 = arith.constant 1 : index
    %c0_64 = arith.constant 0 : index
    %159 = vector.load %arg4[%c1, %c0_64] : memref<2x32xf32, #tpu.memory_space<vmem>>, vector<1x32xf32>
    %160 = vector.shape_cast %159 : vector<1x32xf32> to vector<32xf32>
    %c1_65 = arith.constant 1 : index
    %c0_66 = arith.constant 0 : index
    %161 = vector.load %arg5[%c1_65, %c0_66] : memref<2x32xf32, #tpu.memory_space<vmem>>, vector<1x32xf32>
    %162 = vector.shape_cast %161 : vector<1x32xf32> to vector<32xf32>
    %cst_67 = arith.constant dense<0.000000e+00> : vector<24xf32>
    %163 = vector.multi_reduction <add>, %158, %cst_67 [1] : vector<24x32xf32> to vector<24xf32>
    %164 = vector.shape_cast %163 : vector<24xf32> to vector<24x1xf32>
    %cst_68 = arith.constant 3.200000e+01 : f32
    %165 = vector.broadcast %cst_68 : f32 to vector<24x1xf32>
    %166 = arith.divf %164, %165 : vector<24x1xf32>
    %167 = vector.broadcast %166 : vector<24x1xf32> to vector<24x32xf32>
    %168 = arith.subf %158, %167 : vector<24x32xf32>
    %169 = arith.mulf %168, %168 : vector<24x32xf32>
    %cst_69 = arith.constant dense<0.000000e+00> : vector<24xf32>
    %170 = vector.multi_reduction <add>, %169, %cst_69 [1] : vector<24x32xf32> to vector<24xf32>
    %171 = vector.shape_cast %170 : vector<24xf32> to vector<24x1xf32>
    %cst_70 = arith.constant 3.200000e+01 : f32
    %172 = vector.broadcast %cst_70 : f32 to vector<24x1xf32>
    %173 = arith.divf %171, %172 : vector<24x1xf32>
    %174 = vector.broadcast %166 : vector<24x1xf32> to vector<24x32xf32>
    %175 = arith.subf %158, %174 : vector<24x32xf32>
    %cst_71 = arith.constant 9.99999996E-13 : f32
    %176 = vector.broadcast %cst_71 : f32 to vector<24x1xf32>
    %177 = arith.addf %173, %176 : vector<24x1xf32>
    %178 = math.rsqrt %177 : vector<24x1xf32>
    %179 = vector.broadcast %178 : vector<24x1xf32> to vector<24x32xf32>
    %180 = arith.mulf %175, %179 : vector<24x32xf32>
    %181 = vector.shape_cast %160 : vector<32xf32> to vector<1x32xf32>
    %182 = vector.broadcast %181 : vector<1x32xf32> to vector<24x32xf32>
    %183 = arith.mulf %180, %182 : vector<24x32xf32>
    %184 = vector.shape_cast %162 : vector<32xf32> to vector<1x32xf32>
    %185 = vector.broadcast %184 : vector<1x32xf32> to vector<24x32xf32>
    %186 = arith.addf %183, %185 : vector<24x32xf32>
    %c1_72 = arith.constant 1 : index
    %c0_73 = arith.constant 0 : index
    %c0_74 = arith.constant 0 : index
    %187 = vector.load %arg6[%c1_72, %c0_73, %c0_74] : memref<2x32x96xbf16, #tpu.memory_space<vmem>>, vector<1x32x96xbf16>
    %188 = vector.shape_cast %187 : vector<1x32x96xbf16> to vector<32x96xbf16>
    %189 = arith.truncf %186 : vector<24x32xf32> to vector<24x32xbf16>
    %cst_75 = arith.constant dense<0.000000e+00> : vector<24x96xf32>
    %190 = tpu.matmul %189, %188, %cst_75 {dimension_numbers = #tpu.dot_dimension_numbers<[1], [0], [0], [1], [0, 0, 1, 1], [], []>} : vector<24x32xbf16>, vector<32x96xbf16>, vector<24x96xf32> -> vector<24x96xf32>
    %c1_76 = arith.constant 1 : index
    %c0_77 = arith.constant 0 : index
    %191 = vector.load %arg7[%c1_76, %c0_77] : memref<2x96xf32, #tpu.memory_space<vmem>>, vector<1x96xf32>
    %192 = vector.shape_cast %191 : vector<1x96xf32> to vector<96xf32>
    %193 = vector.shape_cast %192 : vector<96xf32> to vector<1x96xf32>
    %194 = vector.broadcast %193 : vector<1x96xf32> to vector<24x96xf32>
    %195 = arith.addf %190, %194 : vector<24x96xf32>
    %196 = vector.extract_strided_slice %195 {offsets = [0, 0], sizes = [24, 32], strides = [1, 1]} : vector<24x96xf32> to vector<24x32xf32>
    %197 = vector.extract_strided_slice %195 {offsets = [0, 32], sizes = [24, 32], strides = [1, 1]} : vector<24x96xf32> to vector<24x32xf32>
    %198 = vector.extract_strided_slice %195 {offsets = [0, 64], sizes = [24, 32], strides = [1, 1]} : vector<24x96xf32> to vector<24x32xf32>
    %c1_78 = arith.constant 1 : index
    %c0_79 = arith.constant 0 : index
    %199 = vector.load %arg9[%c1_78, %c0_79] : memref<2x32xf32, #tpu.memory_space<vmem>>, vector<1x32xf32>
    %200 = vector.shape_cast %199 : vector<1x32xf32> to vector<32xf32>
    %201 = vector.shape_cast %200 : vector<32xf32> to vector<1x32xf32>
    %202 = vector.extract_strided_slice %196 {offsets = [0, 0], sizes = [24, 16], strides = [1, 1]} : vector<24x32xf32> to vector<24x16xf32>
    %203 = arith.truncf %202 : vector<24x16xf32> to vector<24x16xbf16>
    %204 = vector.extract_strided_slice %197 {offsets = [0, 0], sizes = [24, 16], strides = [1, 1]} : vector<24x32xf32> to vector<24x16xf32>
    %205 = arith.truncf %204 : vector<24x16xf32> to vector<24x16xbf16>
    %cst_80 = arith.constant dense<0.000000e+00> : vector<24x24xf32>
    %206 = tpu.matmul %203, %205, %cst_80 {dimension_numbers = #tpu.dot_dimension_numbers<[1], [1], [0], [0], [0, 0, 1, 0], [], []>} : vector<24x16xbf16>, vector<24x16xbf16>, vector<24x24xf32> -> vector<24x24xf32>
    %207 = arith.addf %206, %6 : vector<24x24xf32>
    %cst_81 = arith.constant dense<0xFF800000> : vector<24xf32>
    %208 = vector.multi_reduction <maximumf>, %207, %cst_81 [1] : vector<24x24xf32> to vector<24xf32>
    %209 = vector.shape_cast %208 : vector<24xf32> to vector<24x1xf32>
    %210 = vector.broadcast %209 : vector<24x1xf32> to vector<24x24xf32>
    %211 = arith.subf %207, %210 : vector<24x24xf32>
    %212 = math.exp %211 : vector<24x24xf32>
    %cst_82 = arith.constant dense<0.000000e+00> : vector<24xf32>
    %213 = vector.multi_reduction <add>, %212, %cst_82 [1] : vector<24x24xf32> to vector<24xf32>
    %214 = vector.shape_cast %213 : vector<24xf32> to vector<24x1xf32>
    %215 = tpu.reciprocal %214 {approx = true} : vector<24x1xf32> -> vector<24x1xf32>
    %216 = vector.broadcast %215 : vector<24x1xf32> to vector<24x24xf32>
    %217 = arith.mulf %212, %216 : vector<24x24xf32>
    %218 = vector.extract_strided_slice %198 {offsets = [0, 0], sizes = [24, 16], strides = [1, 1]} : vector<24x32xf32> to vector<24x16xf32>
    %219 = arith.truncf %217 : vector<24x24xf32> to vector<24x24xbf16>
    %220 = arith.truncf %218 : vector<24x16xf32> to vector<24x16xbf16>
    %cst_83 = arith.constant dense<0.000000e+00> : vector<24x16xf32>
    %221 = tpu.matmul %219, %220, %cst_83 {dimension_numbers = #tpu.dot_dimension_numbers<[1], [0], [0], [1], [0, 0, 1, 1], [], []>} : vector<24x24xbf16>, vector<24x16xbf16>, vector<24x16xf32> -> vector<24x16xf32>
    %c1_84 = arith.constant 1 : index
    %c0_85 = arith.constant 0 : index
    %c0_86 = arith.constant 0 : index
    %222 = vector.load %arg8[%c1_84, %c0_85, %c0_86] : memref<2x32x32xbf16, #tpu.memory_space<vmem>>, vector<1x32x32xbf16>
    %223 = vector.shape_cast %222 : vector<1x32x32xbf16> to vector<32x32xbf16>
    %224 = vector.extract_strided_slice %223 {offsets = [0, 0], sizes = [16, 32], strides = [1, 1]} : vector<32x32xbf16> to vector<16x32xbf16>
    %225 = arith.truncf %221 : vector<24x16xf32> to vector<24x16xbf16>
    %cst_87 = arith.constant dense<0.000000e+00> : vector<24x32xf32>
    %226 = tpu.matmul %225, %224, %cst_87 {dimension_numbers = #tpu.dot_dimension_numbers<[1], [0], [0], [1], [0, 0, 1, 1], [], []>} : vector<24x16xbf16>, vector<16x32xbf16>, vector<24x32xf32> -> vector<24x32xf32>
    %227 = vector.broadcast %201 : vector<1x32xf32> to vector<24x32xf32>
    %228 = arith.addf %227, %226 : vector<24x32xf32>
    %229 = vector.extract_strided_slice %196 {offsets = [0, 16], sizes = [24, 16], strides = [1, 1]} : vector<24x32xf32> to vector<24x16xf32>
    %230 = arith.truncf %229 : vector<24x16xf32> to vector<24x16xbf16>
    %231 = vector.extract_strided_slice %197 {offsets = [0, 16], sizes = [24, 16], strides = [1, 1]} : vector<24x32xf32> to vector<24x16xf32>
    %232 = arith.truncf %231 : vector<24x16xf32> to vector<24x16xbf16>
    %cst_88 = arith.constant dense<0.000000e+00> : vector<24x24xf32>
    %233 = tpu.matmul %230, %232, %cst_88 {dimension_numbers = #tpu.dot_dimension_numbers<[1], [1], [0], [0], [0, 0, 1, 0], [], []>} : vector<24x16xbf16>, vector<24x16xbf16>, vector<24x24xf32> -> vector<24x24xf32>
    %234 = arith.addf %233, %6 : vector<24x24xf32>
    %cst_89 = arith.constant dense<0xFF800000> : vector<24xf32>
    %235 = vector.multi_reduction <maximumf>, %234, %cst_89 [1] : vector<24x24xf32> to vector<24xf32>
    %236 = vector.shape_cast %235 : vector<24xf32> to vector<24x1xf32>
    %237 = vector.broadcast %236 : vector<24x1xf32> to vector<24x24xf32>
    %238 = arith.subf %234, %237 : vector<24x24xf32>
    %239 = math.exp %238 : vector<24x24xf32>
    %cst_90 = arith.constant dense<0.000000e+00> : vector<24xf32>
    %240 = vector.multi_reduction <add>, %239, %cst_90 [1] : vector<24x24xf32> to vector<24xf32>
    %241 = vector.shape_cast %240 : vector<24xf32> to vector<24x1xf32>
    %242 = tpu.reciprocal %241 {approx = true} : vector<24x1xf32> -> vector<24x1xf32>
    %243 = vector.broadcast %242 : vector<24x1xf32> to vector<24x24xf32>
    %244 = arith.mulf %239, %243 : vector<24x24xf32>
    %245 = vector.extract_strided_slice %198 {offsets = [0, 16], sizes = [24, 16], strides = [1, 1]} : vector<24x32xf32> to vector<24x16xf32>
    %246 = arith.truncf %244 : vector<24x24xf32> to vector<24x24xbf16>
    %247 = arith.truncf %245 : vector<24x16xf32> to vector<24x16xbf16>
    %cst_91 = arith.constant dense<0.000000e+00> : vector<24x16xf32>
    %248 = tpu.matmul %246, %247, %cst_91 {dimension_numbers = #tpu.dot_dimension_numbers<[1], [0], [0], [1], [0, 0, 1, 1], [], []>} : vector<24x24xbf16>, vector<24x16xbf16>, vector<24x16xf32> -> vector<24x16xf32>
    %c1_92 = arith.constant 1 : index
    %c0_93 = arith.constant 0 : index
    %c0_94 = arith.constant 0 : index
    %249 = vector.load %arg8[%c1_92, %c0_93, %c0_94] : memref<2x32x32xbf16, #tpu.memory_space<vmem>>, vector<1x32x32xbf16>
    %250 = vector.shape_cast %249 : vector<1x32x32xbf16> to vector<32x32xbf16>
    %251 = vector.extract_strided_slice %250 {offsets = [16, 0], sizes = [16, 32], strides = [1, 1]} : vector<32x32xbf16> to vector<16x32xbf16>
    %252 = arith.truncf %248 : vector<24x16xf32> to vector<24x16xbf16>
    %cst_95 = arith.constant dense<0.000000e+00> : vector<24x32xf32>
    %253 = tpu.matmul %252, %251, %cst_95 {dimension_numbers = #tpu.dot_dimension_numbers<[1], [0], [0], [1], [0, 0, 1, 1], [], []>} : vector<24x16xbf16>, vector<16x32xbf16>, vector<24x32xf32> -> vector<24x32xf32>
    %254 = arith.addf %228, %253 : vector<24x32xf32>
    %255 = arith.addf %158, %254 : vector<24x32xf32>
    %c1_96 = arith.constant 1 : index
    %c0_97 = arith.constant 0 : index
    %256 = vector.load %arg10[%c1_96, %c0_97] : memref<2x32xf32, #tpu.memory_space<vmem>>, vector<1x32xf32>
    %257 = vector.shape_cast %256 : vector<1x32xf32> to vector<32xf32>
    %c1_98 = arith.constant 1 : index
    %c0_99 = arith.constant 0 : index
    %258 = vector.load %arg11[%c1_98, %c0_99] : memref<2x32xf32, #tpu.memory_space<vmem>>, vector<1x32xf32>
    %259 = vector.shape_cast %258 : vector<1x32xf32> to vector<32xf32>
    %cst_100 = arith.constant dense<0.000000e+00> : vector<24xf32>
    %260 = vector.multi_reduction <add>, %255, %cst_100 [1] : vector<24x32xf32> to vector<24xf32>
    %261 = vector.shape_cast %260 : vector<24xf32> to vector<24x1xf32>
    %cst_101 = arith.constant 3.200000e+01 : f32
    %262 = vector.broadcast %cst_101 : f32 to vector<24x1xf32>
    %263 = arith.divf %261, %262 : vector<24x1xf32>
    %264 = vector.broadcast %263 : vector<24x1xf32> to vector<24x32xf32>
    %265 = arith.subf %255, %264 : vector<24x32xf32>
    %266 = arith.mulf %265, %265 : vector<24x32xf32>
    %cst_102 = arith.constant dense<0.000000e+00> : vector<24xf32>
    %267 = vector.multi_reduction <add>, %266, %cst_102 [1] : vector<24x32xf32> to vector<24xf32>
    %268 = vector.shape_cast %267 : vector<24xf32> to vector<24x1xf32>
    %cst_103 = arith.constant 3.200000e+01 : f32
    %269 = vector.broadcast %cst_103 : f32 to vector<24x1xf32>
    %270 = arith.divf %268, %269 : vector<24x1xf32>
    %271 = vector.broadcast %263 : vector<24x1xf32> to vector<24x32xf32>
    %272 = arith.subf %255, %271 : vector<24x32xf32>
    %cst_104 = arith.constant 9.99999996E-13 : f32
    %273 = vector.broadcast %cst_104 : f32 to vector<24x1xf32>
    %274 = arith.addf %270, %273 : vector<24x1xf32>
    %275 = math.rsqrt %274 : vector<24x1xf32>
    %276 = vector.broadcast %275 : vector<24x1xf32> to vector<24x32xf32>
    %277 = arith.mulf %272, %276 : vector<24x32xf32>
    %278 = vector.shape_cast %257 : vector<32xf32> to vector<1x32xf32>
    %279 = vector.broadcast %278 : vector<1x32xf32> to vector<24x32xf32>
    %280 = arith.mulf %277, %279 : vector<24x32xf32>
    %281 = vector.shape_cast %259 : vector<32xf32> to vector<1x32xf32>
    %282 = vector.broadcast %281 : vector<1x32xf32> to vector<24x32xf32>
    %283 = arith.addf %280, %282 : vector<24x32xf32>
    %c1_105 = arith.constant 1 : index
    %c0_106 = arith.constant 0 : index
    %c0_107 = arith.constant 0 : index
    %284 = vector.load %arg12[%c1_105, %c0_106, %c0_107] : memref<2x32x64xbf16, #tpu.memory_space<vmem>>, vector<1x32x64xbf16>
    %285 = vector.shape_cast %284 : vector<1x32x64xbf16> to vector<32x64xbf16>
    %286 = arith.truncf %283 : vector<24x32xf32> to vector<24x32xbf16>
    %cst_108 = arith.constant dense<0.000000e+00> : vector<24x64xf32>
    %287 = tpu.matmul %286, %285, %cst_108 {dimension_numbers = #tpu.dot_dimension_numbers<[1], [0], [0], [1], [0, 0, 1, 1], [], []>} : vector<24x32xbf16>, vector<32x64xbf16>, vector<24x64xf32> -> vector<24x64xf32>
    %c1_109 = arith.constant 1 : index
    %c0_110 = arith.constant 0 : index
    %288 = vector.load %arg13[%c1_109, %c0_110] : memref<2x64xf32, #tpu.memory_space<vmem>>, vector<1x64xf32>
    %289 = vector.shape_cast %288 : vector<1x64xf32> to vector<64xf32>
    %290 = vector.shape_cast %289 : vector<64xf32> to vector<1x64xf32>
    %291 = vector.broadcast %290 : vector<1x64xf32> to vector<24x64xf32>
    %292 = arith.addf %287, %291 : vector<24x64xf32>
    %cst_111 = arith.constant 5.000000e-01 : f32
    %293 = vector.broadcast %cst_111 : f32 to vector<24x64xf32>
    %294 = arith.mulf %293, %292 : vector<24x64xf32>
    %cst_112 = arith.constant 0.707106769 : f32
    %295 = vector.broadcast %cst_112 : f32 to vector<24x64xf32>
    %296 = arith.mulf %292, %295 : vector<24x64xf32>
    %297 = math.erf %296 : vector<24x64xf32>
    %cst_113 = arith.constant 1.000000e+00 : f32
    %298 = vector.broadcast %cst_113 : f32 to vector<24x64xf32>
    %299 = arith.addf %298, %297 : vector<24x64xf32>
    %300 = arith.mulf %294, %299 : vector<24x64xf32>
    %c1_114 = arith.constant 1 : index
    %c0_115 = arith.constant 0 : index
    %c0_116 = arith.constant 0 : index
    %301 = vector.load %arg14[%c1_114, %c0_115, %c0_116] : memref<2x64x32xbf16, #tpu.memory_space<vmem>>, vector<1x64x32xbf16>
    %302 = vector.shape_cast %301 : vector<1x64x32xbf16> to vector<64x32xbf16>
    %303 = arith.truncf %300 : vector<24x64xf32> to vector<24x64xbf16>
    %cst_117 = arith.constant dense<0.000000e+00> : vector<24x32xf32>
    %304 = tpu.matmul %303, %302, %cst_117 {dimension_numbers = #tpu.dot_dimension_numbers<[1], [0], [0], [1], [0, 0, 1, 1], [], []>} : vector<24x64xbf16>, vector<64x32xbf16>, vector<24x32xf32> -> vector<24x32xf32>
    %305 = arith.addf %255, %304 : vector<24x32xf32>
    %c1_118 = arith.constant 1 : index
    %c0_119 = arith.constant 0 : index
    %306 = vector.load %arg15[%c1_118, %c0_119] : memref<2x32xf32, #tpu.memory_space<vmem>>, vector<1x32xf32>
    %307 = vector.shape_cast %306 : vector<1x32xf32> to vector<32xf32>
    %308 = vector.shape_cast %307 : vector<32xf32> to vector<1x32xf32>
    %309 = vector.broadcast %308 : vector<1x32xf32> to vector<24x32xf32>
    %310 = arith.addf %305, %309 : vector<24x32xf32>
    %c0_120 = arith.constant 0 : index
    %c0_121 = arith.constant 0 : index
    %311 = vector.load %arg16[%c0_120, %c0_121] : memref<1x32xf32, #tpu.memory_space<vmem>>, vector<1x32xf32>
    %312 = vector.shape_cast %311 : vector<1x32xf32> to vector<32xf32>
    %c0_122 = arith.constant 0 : index
    %c0_123 = arith.constant 0 : index
    %313 = vector.load %arg17[%c0_122, %c0_123] : memref<1x32xf32, #tpu.memory_space<vmem>>, vector<1x32xf32>
    %314 = vector.shape_cast %313 : vector<1x32xf32> to vector<32xf32>
    %cst_124 = arith.constant dense<0.000000e+00> : vector<24xf32>
    %315 = vector.multi_reduction <add>, %310, %cst_124 [1] : vector<24x32xf32> to vector<24xf32>
    %316 = vector.shape_cast %315 : vector<24xf32> to vector<24x1xf32>
    %cst_125 = arith.constant 3.200000e+01 : f32
    %317 = vector.broadcast %cst_125 : f32 to vector<24x1xf32>
    %318 = arith.divf %316, %317 : vector<24x1xf32>
    %319 = vector.broadcast %318 : vector<24x1xf32> to vector<24x32xf32>
    %320 = arith.subf %310, %319 : vector<24x32xf32>
    %321 = arith.mulf %320, %320 : vector<24x32xf32>
    %cst_126 = arith.constant dense<0.000000e+00> : vector<24xf32>
    %322 = vector.multi_reduction <add>, %321, %cst_126 [1] : vector<24x32xf32> to vector<24xf32>
    %323 = vector.shape_cast %322 : vector<24xf32> to vector<24x1xf32>
    %cst_127 = arith.constant 3.200000e+01 : f32
    %324 = vector.broadcast %cst_127 : f32 to vector<24x1xf32>
    %325 = arith.divf %323, %324 : vector<24x1xf32>
    %326 = vector.broadcast %318 : vector<24x1xf32> to vector<24x32xf32>
    %327 = arith.subf %310, %326 : vector<24x32xf32>
    %cst_128 = arith.constant 9.99999996E-13 : f32
    %328 = vector.broadcast %cst_128 : f32 to vector<24x1xf32>
    %329 = arith.addf %325, %328 : vector<24x1xf32>
    %330 = math.rsqrt %329 : vector<24x1xf32>
    %331 = vector.broadcast %330 : vector<24x1xf32> to vector<24x32xf32>
    %332 = arith.mulf %327, %331 : vector<24x32xf32>
    %333 = vector.shape_cast %312 : vector<32xf32> to vector<1x32xf32>
    %334 = vector.broadcast %333 : vector<1x32xf32> to vector<24x32xf32>
    %335 = arith.mulf %332, %334 : vector<24x32xf32>
    %336 = vector.shape_cast %314 : vector<32xf32> to vector<1x32xf32>
    %337 = vector.broadcast %336 : vector<1x32xf32> to vector<24x32xf32>
    %338 = arith.addf %335, %337 : vector<24x32xf32>
    %339 = vector.extract_strided_slice %338 {offsets = [0, 0], sizes = [4, 32], strides = [1, 1]} : vector<24x32xf32> to vector<4x32xf32>
    %c0_129 = arith.constant 0 : index
    %c0_130 = arith.constant 0 : index
    %340 = vector.load %arg18[%c0_129, %c0_130] : memref<32x32xbf16, #tpu.memory_space<vmem>>, vector<32x32xbf16>
    %341 = arith.truncf %339 : vector<4x32xf32> to vector<4x32xbf16>
    %cst_131 = arith.constant dense<0.000000e+00> : vector<4x32xf32>
    %342 = tpu.matmul %341, %340, %cst_131 {dimension_numbers = #tpu.dot_dimension_numbers<[1], [0], [0], [1], [0, 0, 1, 1], [], []>} : vector<4x32xbf16>, vector<32x32xbf16>, vector<4x32xf32> -> vector<4x32xf32>
    %c0_132 = arith.constant 0 : index
    %c0_133 = arith.constant 0 : index
    %343 = vector.load %arg19[%c0_132, %c0_133] : memref<1x32xf32, #tpu.memory_space<vmem>>, vector<1x32xf32>
    %344 = vector.shape_cast %343 : vector<1x32xf32> to vector<32xf32>
    %345 = vector.shape_cast %344 : vector<32xf32> to vector<1x32xf32>
    %346 = vector.broadcast %345 : vector<1x32xf32> to vector<4x32xf32>
    %347 = arith.addf %342, %346 : vector<4x32xf32>
    %348 = math.tanh %347 : vector<4x32xf32>
    %349 = vector.extract_strided_slice %348 {offsets = [0, 0], sizes = [2, 32], strides = [1, 1]} : vector<4x32xf32> to vector<2x32xf32>
    %350 = vector.extract_strided_slice %348 {offsets = [2, 0], sizes = [2, 32], strides = [1, 1]} : vector<4x32xf32> to vector<2x32xf32>
    %c0_134 = arith.constant 0 : index
    %c0_135 = arith.constant 0 : index
    %351 = vector.load %arg20[%c0_134, %c0_135] : memref<32x128xbf16, #tpu.memory_space<vmem>>, vector<32x128xbf16>
    %352 = arith.truncf %349 : vector<2x32xf32> to vector<2x32xbf16>
    %cst_136 = arith.constant dense<0.000000e+00> : vector<2x128xf32>
    %353 = tpu.matmul %352, %351, %cst_136 {dimension_numbers = #tpu.dot_dimension_numbers<[1], [0], [0], [1], [0, 0, 1, 1], [], []>} : vector<2x32xbf16>, vector<32x128xbf16>, vector<2x128xf32> -> vector<2x128xf32>
    %c0_137 = arith.constant 0 : index
    %c0_138 = arith.constant 0 : index
    %354 = vector.load %arg21[%c0_137, %c0_138] : memref<32x128xbf16, #tpu.memory_space<vmem>>, vector<32x128xbf16>
    %355 = arith.truncf %350 : vector<2x32xf32> to vector<2x32xbf16>
    %cst_139 = arith.constant dense<0.000000e+00> : vector<2x128xf32>
    %356 = tpu.matmul %355, %354, %cst_139 {dimension_numbers = #tpu.dot_dimension_numbers<[1], [0], [0], [1], [0, 0, 1, 1], [], []>} : vector<2x32xbf16>, vector<32x128xbf16>, vector<2x128xf32> -> vector<2x128xf32>
    %357 = arith.addf %353, %356 : vector<2x128xf32>
    %c0_140 = arith.constant 0 : index
    %c0_141 = arith.constant 0 : index
    %358 = vector.load %arg22[%c0_140, %c0_141] : memref<1x128xf32, #tpu.memory_space<vmem>>, vector<1x128xf32>
    %359 = vector.shape_cast %358 : vector<1x128xf32> to vector<128xf32>
    %360 = vector.shape_cast %359 : vector<128xf32> to vector<1x128xf32>
    %361 = vector.broadcast %360 : vector<1x128xf32> to vector<2x128xf32>
    %362 = arith.addf %357, %361 : vector<2x128xf32>
    %c0_142 = arith.constant 0 : index
    %c0_143 = arith.constant 0 : index
    %363 = vector.load %arg23[%c0_142, %c0_143] : memref<2x128xf32, #tpu.memory_space<vmem>>, vector<2x128xf32>
    tpu.vector_store %arg23[%c0_142, %c0_143], %362 {strides = array<i32>} : memref<2x128xf32, #tpu.memory_space<vmem>>, vector<2x128xf32>,
    return
  }
}

</mosaic_0001>

<llo_original>
// kernel: ssl_visual_classifier.1
$region0: #{ssl_visual_classifier.1}
  #allocation0 [shape = 'u32[]', space=smem, size = 0x4, offset = 0x4, fixed_abs, tag = 'smem constant byte address 0x4 - core index']
  #allocation1 [shape = 'u32[144,128]{1,0:T(1,128)}', space=vmem, size = 0x12000, scoped, tag = 'internal scratch']
  %s0 = inlined_call_operand.vmem [shape: f32[24,192], index: 0, kind: input, shape index: {}]
  %s1 = inlined_call_operand.vmem [shape: bf16[192,32], index: 1, kind: input, shape index: {}]
  %s2 = inlined_call_operand.vmem [shape: f32[24,32], index: 2, kind: input, shape index: {}]
  %s3 = inlined_call_operand.vmem [shape: f32[24,24], index: 3, kind: input, shape index: {}]
  %s4 = inlined_call_operand.vmem [shape: f32[2,32], index: 4, kind: input, shape index: {}]
  %s5 = inlined_call_operand.vmem [shape: f32[2,32], index: 5, kind: input, shape index: {}]
  %s6 = inlined_call_operand.vmem [shape: bf16[2,32,96], index: 6, kind: input, shape index: {}]
  %s7 = inlined_call_operand.vmem [shape: f32[2,96], index: 7, kind: input, shape index: {}]
  %s8 = inlined_call_operand.vmem [shape: bf16[2,32,32], index: 8, kind: input, shape index: {}]
  %s9 = inlined_call_operand.vmem [shape: f32[2,32], index: 9, kind: input, shape index: {}]
  %s10 = inlined_call_operand.vmem [shape: f32[2,32], index: 10, kind: input, shape index: {}]
  %s11 = inlined_call_operand.vmem [shape: f32[2,32], index: 11, kind: input, shape index: {}]
  %s12 = inlined_call_operand.vmem [shape: bf16[2,32,64], index: 12, kind: input, shape index: {}]
  %s13 = inlined_call_operand.vmem [shape: f32[2,64], index: 13, kind: input, shape index: {}]
  %s14 = inlined_call_operand.vmem [shape: bf16[2,64,32], index: 14, kind: input, shape index: {}]
  %s15 = inlined_call_operand.vmem [shape: f32[2,32], index: 15, kind: input, shape index: {}]
  %s16 = inlined_call_operand.vmem [shape: f32[1,32], index: 16, kind: input, shape index: {}]
  %s17 = inlined_call_operand.vmem [shape: f32[1,32], index: 17, kind: input, shape index: {}]
  %s18 = inlined_call_operand.vmem [shape: bf16[32,32], index: 18, kind: input, shape index: {}]
  %s19 = inlined_call_operand.vmem [shape: f32[1,32], index: 19, kind: input, shape index: {}]
  %s20 = inlined_call_operand.vmem [shape: bf16[32,128], index: 20, kind: input, shape index: {}]
  %s21 = inlined_call_operand.vmem [shape: bf16[32,128], index: 21, kind: input, shape index: {}]
  %s22 = inlined_call_operand.vmem [shape: f32[1,128], index: 22, kind: input, shape index: {}]
  %s23 = inlined_call_operand.hbm [shape: f32[2,128], index: 23, kind: output, shape index: {}]
  %s24 = sld [smem:[#allocation0]]
  $region102: #{ssl_visual_classifier.1} parent=0
    _
  %s26 = ssub.s32 1, %s24
  %s27 = scalar_select 0, %s26, %s24
  $region1: #{ssl_visual_classifier.1} parent=0
    #allocation2 [shape = 'u8[1024]{0}', space=vmem, size = 0x400, scoped, tag = 'output window, operand 0, single buffered']
    #allocation3 [shape = 's32[1]{0}', space=sflag, size = 0x4, scoped, tag = 'scoped memory for ssl_visual_classifier.1']
    %28 = vsyncpa [#allocation3], 0
    // Predicated region
    $region2: #{ssl_visual_classifier.1} parent=1 // pred_check
      _
    $region3: #{ssl_visual_classifier.1} parent=1 // pred_check_branch
      %30 = sbr.rel (0) target = $region5
    $region4: #{ssl_visual_classifier.1} parent=1 // pred_region
      _
    $region5: #{ssl_visual_classifier.1} parent=1 // pred_fallthru
      _
    // Predicated region
    $region6: #{ssl_visual_classifier.1} parent=1 // pred_check
      _
    $region7: #{ssl_visual_classifier.1} parent=1 // pred_check_branch
      %32 = sbr.rel (0) target = $region9
    $region8: #{ssl_visual_classifier.1} parent=1 // pred_region
      _
    $region9: #{ssl_visual_classifier.1} parent=1 // pred_fallthru
      _
    // Predicated region
    $region10: #{ssl_visual_classifier.1} parent=1 // pred_check
      _
    $region11: #{ssl_visual_classifier.1} parent=1 // pred_check_branch
      %34 = sbr.rel (0) target = $region13
    $region12: #{ssl_visual_classifier.1} parent=1 // pred_region
      _
    $region13: #{ssl_visual_classifier.1} parent=1 // pred_fallthru
      _
    // Predicated region
    $region14: #{ssl_visual_classifier.1} parent=1 // pred_check
      _
    $region15: #{ssl_visual_classifier.1} parent=1 // pred_check_branch
      %36 = sbr.rel (0) target = $region17
    $region16: #{ssl_visual_classifier.1} parent=1 // pred_region
      _
    $region17: #{ssl_visual_classifier.1} parent=1 // pred_fallthru
      _
    // Predicated region
    $region18: #{ssl_visual_classifier.1} parent=1 // pred_check
      _
    $region19: #{ssl_visual_classifier.1} parent=1 // pred_check_branch
      %38 = sbr.rel (0) target = $region21
    $region20: #{ssl_visual_classifier.1} parent=1 // pred_region
      _
    $region21: #{ssl_visual_classifier.1} parent=1 // pred_fallthru
      _
    // Predicated region
    $region22: #{ssl_visual_classifier.1} parent=1 // pred_check
      _
    $region23: #{ssl_visual_classifier.1} parent=1 // pred_check_branch
      %40 = sbr.rel (0) target = $region25
    $region24: #{ssl_visual_classifier.1} parent=1 // pred_region
      _
    $region25: #{ssl_visual_classifier.1} parent=1 // pred_fallthru
      _
    // Predicated region
    $region26: #{ssl_visual_classifier.1} parent=1 // pred_check
      _
    $region27: #{ssl_visual_classifier.1} parent=1 // pred_check_branch
      %42 = sbr.rel (0) target = $region29
    $region28: #{ssl_visual_classifier.1} parent=1 // pred_region
      _
    $region29: #{ssl_visual_classifier.1} parent=1 // pred_fallthru
      _
    // Predicated region
    $region30: #{ssl_visual_classifier.1} parent=1 // pred_check
      _
    $region31: #{ssl_visual_classifier.1} parent=1 // pred_check_branch
      %44 = sbr.rel (0) target = $region33
    $region32: #{ssl_visual_classifier.1} parent=1 // pred_region
      _
    $region33: #{ssl_visual_classifier.1} parent=1 // pred_fallthru
      _
    // Predicated region
    $region34: #{ssl_visual_classifier.1} parent=1 // pred_check
      _
    $region35: #{ssl_visual_classifier.1} parent=1 // pred_check_branch
      %46 = sbr.rel (0) target = $region37
    $region36: #{ssl_visual_classifier.1} parent=1 // pred_region
      _
    $region37: #{ssl_visual_classifier.1} parent=1 // pred_fallthru
      _
    // Predicated region
    $region38: #{ssl_visual_classifier.1} parent=1 // pred_check
      _
    $region39: #{ssl_visual_classifier.1} parent=1 // pred_check_branch
      %48 = sbr.rel (0) target = $region41
    $region40: #{ssl_visual_classifier.1} parent=1 // pred_region
      _
    $region41: #{ssl_visual_classifier.1} parent=1 // pred_fallthru
      _
    // Predicated region
    $region42: #{ssl_visual_classifier.1} parent=1 // pred_check
      _
    $region43: #{ssl_visual_classifier.1} parent=1 // pred_check_branch
      %50 = sbr.rel (0) target = $region45
    $region44: #{ssl_visual_classifier.1} parent=1 // pred_region
      _
    $region45: #{ssl_visual_classifier.1} parent=1 // pred_fallthru
      _
    // Predicated region
    $region46: #{ssl_visual_classifier.1} parent=1 // pred_check
      _
    $region47: #{ssl_visual_classifier.1} parent=1 // pred_check_branch
      %52 = sbr.rel (0) target = $region49
    $region48: #{ssl_visual_classifier.1} parent=1 // pred_region
      _
    $region49: #{ssl_visual_classifier.1} parent=1 // pred_fallthru
      _
    // Predicated region
    $region50: #{ssl_visual_classifier.1} parent=1 // pred_check
      _
    $region51: #{ssl_visual_classifier.1} parent=1 // pred_check_branch
      %54 = sbr.rel (0) target = $region53
    $region52: #{ssl_visual_classifier.1} parent=1 // pred_region
      _
    $region53: #{ssl_visual_classifier.1} parent=1 // pred_fallthru
      _
    // Predicated region
    $region54: #{ssl_visual_classifier.1} parent=1 // pred_check
      _
    $region55: #{ssl_visual_classifier.1} parent=1 // pred_check_branch
      %56 = sbr.rel (0) target = $region57
    $region56: #{ssl_visual_classifier.1} parent=1 // pred_region
      _
    $region57: #{ssl_visual_classifier.1} parent=1 // pred_fallthru
      _
    // Predicated region
    $region58: #{ssl_visual_classifier.1} parent=1 // pred_check
      _
    $region59: #{ssl_visual_classifier.1} parent=1 // pred_check_branch
      %58 = sbr.rel (0) target = $region61
    $region60: #{ssl_visual_classifier.1} parent=1 // pred_region
      _
    $region61: #{ssl_visual_classifier.1} parent=1 // pred_fallthru
      _
    // Predicated region
    $region62: #{ssl_visual_classifier.1} parent=1 // pred_check
      _
    $region63: #{ssl_visual_classifier.1} parent=1 // pred_check_branch
      %60 = sbr.rel (0) target = $region65
    $region64: #{ssl_visual_classifier.1} parent=1 // pred_region
      _
    $region65: #{ssl_visual_classifier.1} parent=1 // pred_fallthru
      _
    // Predicated region
    $region66: #{ssl_visual_classifier.1} parent=1 // pred_check
      _
    $region67: #{ssl_visual_classifier.1} parent=1 // pred_check_branch
      %62 = sbr.rel (0) target = $region69
    $region68: #{ssl_visual_classifier.1} parent=1 // pred_region
      _
    $region69: #{ssl_visual_classifier.1} parent=1 // pred_fallthru
      _
    // Predicated region
    $region70: #{ssl_visual_classifier.1} parent=1 // pred_check
      _
    $region71: #{ssl_visual_classifier.1} parent=1 // pred_check_branch
      %64 = sbr.rel (0) target = $region73
    $region72: #{ssl_visual_classifier.1} parent=1 // pred_region
      _
    $region73: #{ssl_visual_classifier.1} parent=1 // pred_fallthru
      _
    // Predicated region
    $region74: #{ssl_visual_classifier.1} parent=1 // pred_check
      _
    $region75: #{ssl_visual_classifier.1} parent=1 // pred_check_branch
      %66 = sbr.rel (0) target = $region77
    $region76: #{ssl_visual_classifier.1} parent=1 // pred_region
      _
    $region77: #{ssl_visual_classifier.1} parent=1 // pred_fallthru
      _
    // Predicated region
    $region78: #{ssl_visual_classifier.1} parent=1 // pred_check
      _
    $region79: #{ssl_visual_classifier.1} parent=1 // pred_check_branch
      %68 = sbr.rel (0) target = $region81
    $region80: #{ssl_visual_classifier.1} parent=1 // pred_region
      _
    $region81: #{ssl_visual_classifier.1} parent=1 // pred_fallthru
      _
    // Predicated region
    $region82: #{ssl_visual_classifier.1} parent=1 // pred_check
      _
    $region83: #{ssl_visual_classifier.1} parent=1 // pred_check_branch
      %70 = sbr.rel (0) target = $region85
    $region84: #{ssl_visual_classifier.1} parent=1 // pred_region
      _
    $region85: #{ssl_visual_classifier.1} parent=1 // pred_fallthru
      _
    // Predicated region
    $region86: #{ssl_visual_classifier.1} parent=1 // pred_check
      _
    $region87: #{ssl_visual_classifier.1} parent=1 // pred_check_branch
      %72 = sbr.rel (0) target = $region89
    $region88: #{ssl_visual_classifier.1} parent=1 // pred_region
      _
    $region89: #{ssl_visual_classifier.1} parent=1 // pred_fallthru
      _
    // Predicated region
    $region90: #{ssl_visual_classifier.1} parent=1 // pred_check
      _
    $region91: #{ssl_visual_classifier.1} parent=1 // pred_check_branch
      %74 = sbr.rel (0) target = $region93
    $region92: #{ssl_visual_classifier.1} parent=1 // pred_region
      _
    $region93: #{ssl_visual_classifier.1} parent=1 // pred_fallthru
      _
    %v76 = vld [vmem:[%s0] sm:$0xff]
    %v77 = vld [vmem:[%s0 + $0x8] sm:$0xff]
    %v78 = vld [vmem:[%s0 + $0x10] sm:$0xff]
    %v79 = vld [vmem:[%s0 + $0x18] sm:$0xff]
    %v80 = vld [vmem:[%s0 + $0x20] sm:$0xff]
    %v81 = vld [vmem:[%s0 + $0x28] sm:$0xff]
    %v82 = vld [vmem:[%s1] sm:$0xf]
    %v83 = vld [vmem:[%s1 + $0x4] sm:$0xf]
    %v84 = vld [vmem:[%s1 + $0x8] sm:$0xf]
    %v85 = vld [vmem:[%s1 + $0xc] sm:$0xf]
    %v86 = vld [vmem:[%s1 + $0x10] sm:$0xf]
    %v87 = vld [vmem:[%s1 + $0x14] sm:$0xf]
    %v88 = vld [vmem:[%s1 + $0x18] sm:$0xf]
    %v89 = vld [vmem:[%s1 + $0x1c] sm:$0xf]
    %v90 = vld [vmem:[%s1 + $0x20] sm:$0xf]
    %v91 = vld [vmem:[%s1 + $0x24] sm:$0xf]
    %v92 = vld [vmem:[%s1 + $0x28] sm:$0xf]
    %v93 = vld [vmem:[%s1 + $0x2c] sm:$0xf]
    %v94 = vld [vmem:[%s1 + $0x30] sm:$0xf]
    %v95 = vld [vmem:[%s1 + $0x34] sm:$0xf]
    %v96 = vld [vmem:[%s1 + $0x38] sm:$0xf]
    %v97 = vld [vmem:[%s1 + $0x3c] sm:$0xf]
    %v98 = vld [vmem:[%s1 + $0x40] sm:$0xf]
    %v99 = vld [vmem:[%s1 + $0x44] sm:$0xf]
    %v100 = vld [vmem:[%s1 + $0x48] sm:$0xf]
    %v101 = vld [vmem:[%s1 + $0x4c] sm:$0xf]
    %v102 = vld [vmem:[%s1 + $0x50] sm:$0xf]
    %v103 = vld [vmem:[%s1 + $0x54] sm:$0xf]
    %v104 = vld [vmem:[%s1 + $0x58] sm:$0xf]
    %v105 = vld [vmem:[%s1 + $0x5c] sm:$0xf]
    %v106 = vpack.c.bf16 %v78, %v76
    %v107 = vpack.c.bf16 %v79, %v77
    %v108 = vpack.c.bf16 %v80, %v80
    %v109 = vpack.c.bf16 %v81, %v81
    %v110 = vld [vmem:[%s2] sm:$0xff]
    %v111 = vld [vmem:[%s2 + $0x8] sm:$0xff]
    %v112 = vld [vmem:[%s2 + $0x10] sm:$0xff]
    %v137 = vunpack.c.l.b16 %v82
    %v138 = vunpack.c.l.b16 %v83
    %v139 = vunpack.c.l.b16 %v84
    %v140 = vunpack.c.l.b16 %v85
    %v141 = vunpack.c.l.b16 %v86
    %v142 = vunpack.c.l.b16 %v87
    %v143 = vunpack.c.l.b16 %v88
    %v144 = vunpack.c.l.b16 %v89
    %v145 = vunpack.c.l.b16 %v90
    %v146 = vunpack.c.l.b16 %v91
    %v147 = vunpack.c.l.b16 %v92
    %v148 = vunpack.c.l.b16 %v93
    %v149 = vunpack.c.l.b16 %v94
    %v150 = vunpack.c.l.b16 %v95
    %v151 = vunpack.c.l.b16 %v96
    %v152 = vunpack.c.l.b16 %v97
    %v153 = vunpack.c.l.b16 %v98
    %v154 = vunpack.c.l.b16 %v99
    %v155 = vunpack.c.l.b16 %v100
    %v156 = vunpack.c.l.b16 %v101
    %v157 = vunpack.c.l.b16 %v102
    %v158 = vunpack.c.l.b16 %v103
    %v159 = vunpack.c.l.b16 %v104
    %v160 = vunpack.c.l.b16 %v105
    %v161 = vpack.c.b16 %v138, %v137
    %v162 = vpack.c.b16 %v140, %v139
    %v163 = vpack.c.b16 %v142, %v141
    %v164 = vpack.c.b16 %v144, %v143
    %v165 = vpack.c.b16 %v146, %v145
    %v166 = vpack.c.b16 %v148, %v147
    %v167 = vpack.c.b16 %v150, %v149
    %v168 = vpack.c.b16 %v152, %v151
    %v169 = vpack.c.b16 %v154, %v153
    %v170 = vpack.c.b16 %v156, %v155
    %v171 = vpack.c.b16 %v158, %v157
    %v172 = vpack.c.b16 %v160, %v159
    %vm185 = vcmask 523264
    %v187 = vsel %vm185, %v107, 0
    %v190 = vsel %vm185, %v109, 0
    %192 = vmatprep.subr.bf16.mxu0 0
    %193 = vmatpush1.bf16.msra.mxu0 %v161
    %194 = vmatprep.subr.bf16.mxu0 0
    %195 = vmatpush1.bf16.msra.mxu0 %v162
    %196 = vmatprep.subr.bf16.mxu0 0
    %197 = vmatpush1.bf16.msra.mxu0 %v163
    %198 = vmatprep.subr.bf16.mxu0 0
    %199 = vmatpush1.bf16.msra.mxu0 %v164
    %200 = vmatprep.subr.bf16.mxu0 0
    %201 = vmatpush1.bf16.msra.mxu0 %v165
    %202 = vmatprep.subr.bf16.mxu0 0
    %203 = vmatpush1.bf16.msra.mxu0 %v166
    %204 = vmatprep.subr.bf16.mxu0 0
    %205 = vmatpush1.bf16.msra.mxu0 %v167
    %206 = vmatprep.subr.bf16.mxu0 0
    %207 = vmatpush1.bf16.msra.mxu0 %v168
    %208 = vmatprep.subr.bf16.mxu0 0
    %209 = vmatpush1.bf16.msra.mxu0 %v169
    %210 = vmatprep.subr.bf16.mxu0 0
    %211 = vmatpush1.bf16.msra.mxu0 %v170
    %212 = vmatprep.subr.bf16.mxu0 0
    %213 = vmatpush1.bf16.msra.mxu0 %v171
    %214 = vmatprep.subr.bf16.mxu0 0
    %215 = vmatpush1.bf16.msra.mxu0 %v172
    %216 = vmatprep.subr.bf16.mxu0 0
    %217 = vmatpush1.bf16.msra.mxu0 0
    %218 = vmatprep.subr.bf16.mxu0 0
    %219 = vmatpush1.bf16.msra.mxu0 0
    %220 = vmatprep.subr.bf16.mxu0 0
    %221 = vmatpush1.bf16.msra.mxu0 0
    %222 = vmatprep.subr.bf16.mxu0 0
    %223 = vmatpush1.bf16.msra.mxu0 0
    %224 = vmatprep.mubr.bf16.mxu0 %v187
    %225 = vmatmul.mubr.bf16.gmra.mrb[0].mxu0 %v106
    %v226 = vpop.f32.mrb[0].mxu0
    %v227 = vadd.f32 %v110, %v226
    %v228 = vpop.f32.mrb[0].mxu0
    %v229 = vpop.f32.mrb[0].mxu0
    %v230 = vadd.f32 %v111, %v229
    %v231 = vpop.f32.mrb[0].mxu0
    %232 = vmatprep.mubr.bf16.mxu0 %v190
    %233 = vmatmul.mubr.bf16.gmra.mrb[0].mxu0 %v108
    %v234 = vpop.f32.mrb[0].mxu0
    %v235 = vadd.f32 %v112, %v234
    %v236 = vpop.f32.mrb[0].mxu0
    %v237 = vpop.f32.mrb[0].mxu0
    %v238 = vpop.f32.mrb[0].mxu0
    %239 = vdwg.mxu0
    %v240 = vld [vmem:[%s3] sm:$0xff]
    %v241 = vld [vmem:[%s3 + $0x8] sm:$0xff]
    %v242 = vld [vmem:[%s3 + $0x10] sm:$0xff]
    %v243 = vld [vmem:[%s4] sm:$0x1]
    %v244 = vld [vmem:[%s5] sm:$0x1]
    %vm245 = vcmask 261120
    %v246 = vsel %vm245, %v227, 0.0
    %247 = vadd.xlane.f32.xlu0 %v246
    %v248 = vpop.xlane.xlu0 %247
    %v249 = vsel %vm245, %v230, 0.0
    %250 = vadd.xlane.f32.xlu0 %v249
    %v251 = vpop.xlane.xlu0 %250
    %v252 = vsel %vm245, %v235, 0.0
    %253 = vadd.xlane.f32.xlu0 %v252
    %v254 = vpop.xlane.xlu0 %253
    %v255 = vrcp.pop 32.0
    %v256 = vmul.f32 %v248, %v255
    %v257 = vmul.f32 %v251, %v255
    %v258 = vmul.f32 %v254, %v255
    %v259 = vsub.f32 %v227, %v256
    %v260 = vsub.f32 %v230, %v257
    %v261 = vsub.f32 %v235, %v258
    %v262 = vmul.f32 %v259, %v259
    %v263 = vmul.f32 %v260, %v260
    %v264 = vmul.f32 %v261, %v261
    %v265 = vsel %vm245, %v262, 0.0
    %266 = vadd.xlane.f32.xlu0 %v265
    %v267 = vpop.xlane.xlu0 %266
    %v268 = vsel %vm245, %v263, 0.0
    %269 = vadd.xlane.f32.xlu0 %v268
    %v270 = vpop.xlane.xlu0 %269
    %v271 = vsel %vm245, %v264, 0.0
    %272 = vadd.xlane.f32.xlu0 %v271
    %v273 = vpop.xlane.xlu0 %272
    %v274 = vmul.f32 %v267, %v255
    %v275 = vmul.f32 %v270, %v255
    %v276 = vmul.f32 %v273, %v255
    %v277 = vadd.f32 %v274, 1e-12
    %v278 = vadd.f32 %v275, 1e-12
    %v279 = vadd.f32 %v276, 1e-12
    %v280 = vrsqrt.pop %v277
    %v281 = vrsqrt.pop %v278
    %v282 = vrsqrt.pop %v279
    %v283 = vmul.f32 %v259, %v280
    %v284 = vmul.f32 %v260, %v281
    %v285 = vmul.f32 %v261, %v282
    %v286 = vlaneseq
    %v287 = vshrl.u32 %v286, 7
    %v288 = vsub.s32 0, %v287
    %v289 = vrot.slane %v243, %v288
    %v290 = vmul.f32 %v283, %v289
    %v291 = vmul.f32 %v284, %v289
    %v292 = vmul.f32 %v285, %v289
    %v293 = vlaneseq
    %v294 = vshrl.u32 %v293, 7
    %v295 = vsub.s32 0, %v294
    %v296 = vrot.slane %v244, %v295
    %v297 = vadd.f32 %v290, %v296
    %v298 = vadd.f32 %v291, %v296
    %v299 = vadd.f32 %v292, %v296
    %v300 = vld [vmem:[%s6] sm:$0xf]
    %v301 = vld [vmem:[%s6 + $0x4] sm:$0xf]
    %v302 = vld [vmem:[%s6 + $0x8] sm:$0xf]
    %v303 = vld [vmem:[%s6 + $0xc] sm:$0xf]
    %v304 = vpack.c.bf16 %v298, %v297
    %v305 = vpack.c.bf16 %v299, %v299
    %v306 = vld [vmem:[%s7] sm:$0x1]
    %v307 = vlaneseq
    %v308 = vshrl.u32 %v307, 7
    %v309 = vsub.s32 0, %v308
    %v310 = vrot.slane %v306, %v309
    %v315 = vunpack.c.l.b16 %v300
    %v316 = vunpack.c.l.b16 %v301
    %v317 = vunpack.c.l.b16 %v302
    %v318 = vunpack.c.l.b16 %v303
    %v319 = vpack.c.b16 %v316, %v315
    %v320 = vpack.c.b16 %v318, %v317
    %v324 = vsel %vm245, %v304, 0
    %v327 = vsel %vm245, %v305, 0
    %329 = vmatprep.subr.bf16.mxu0 0
    %330 = vmatpush1.bf16.msra.mxu0 %v319
    %331 = vmatprep.subr.bf16.mxu0 0
    %332 = vmatpush1.bf16.msra.mxu0 %v320
    %333 = vmatprep.subr.bf16.mxu0 0
    %334 = vmatpush1.bf16.msra.mxu0 0
    %335 = vmatprep.subr.bf16.mxu0 0
    %336 = vmatpush1.bf16.msra.mxu0 0
    %337 = vmatprep.subr.bf16.mxu0 0
    %338 = vmatpush1.bf16.msra.mxu0 0
    %339 = vmatprep.subr.bf16.mxu0 0
    %340 = vmatpush1.bf16.msra.mxu0 0
    %341 = vmatprep.subr.bf16.mxu0 0
    %342 = vmatpush1.bf16.msra.mxu0 0
    %343 = vmatprep.subr.bf16.mxu0 0
    %344 = vmatpush1.bf16.msra.mxu0 0
    %345 = vmatprep.subr.bf16.mxu0 0
    %346 = vmatpush1.bf16.msra.mxu0 0
    %347 = vmatprep.subr.bf16.mxu0 0
    %348 = vmatpush1.bf16.msra.mxu0 0
    %349 = vmatprep.subr.bf16.mxu0 0
    %350 = vmatpush1.bf16.msra.mxu0 0
    %351 = vmatprep.subr.bf16.mxu0 0
    %352 = vmatpush1.bf16.msra.mxu0 0
    %353 = vmatprep.subr.bf16.mxu0 0
    %354 = vmatpush1.bf16.msra.mxu0 0
    %355 = vmatprep.subr.bf16.mxu0 0
    %356 = vmatpush1.bf16.msra.mxu0 0
    %357 = vmatprep.subr.bf16.mxu0 0
    %358 = vmatpush1.bf16.msra.mxu0 0
    %359 = vmatprep.subr.bf16.mxu0 0
    %360 = vmatpush1.bf16.msra.mxu0 0
    %361 = vmatprep.mubr.bf16.mxu0 0
    %362 = vmatmul.mubr.bf16.gmra.mrb[0].mxu0 %v324
    %v363 = vpop.f32.mrb[0].mxu0
    %v364 = vadd.f32 %v310, %v363
    %v365 = vpop.f32.mrb[0].mxu0
    %v366 = vpop.f32.mrb[0].mxu0
    %v367 = vadd.f32 %v310, %v366
    %v368 = vpop.f32.mrb[0].mxu0
    %369 = vmatprep.mubr.bf16.mxu0 0
    %370 = vmatmul.mubr.bf16.gmra.mrb[0].mxu0 %v327
    %v371 = vpop.f32.mrb[0].mxu0
    %v372 = vadd.f32 %v310, %v371
    %v373 = vpop.f32.mrb[0].mxu0
    %v374 = vpop.f32.mrb[0].mxu0
    %v375 = vpop.f32.mrb[0].mxu0
    %376 = vdwg.mxu0
    %v377 = vld [vmem:[%s9] sm:$0x1]
    %v378 = vpack.c.bf16 %v367, %v364
    %v379 = vpack.c.bf16 %v372, %v372
    %382 = vrot.lane.b32.xlu0 %v378, 96
    %v383 = vpop.permute.xlu0 %382
    %384 = vrot.lane.b32.xlu0 %v379, 96
    %v385 = vpop.permute.xlu0 %384
    %vm386 = vcmask 130048
    %v388 = vsel %vm386, %v378, 0
    %v391 = vsel %vm386, %v379, 0
    %v394 = vsel %vm386, %v383, 0
    %v397 = vsel %vm386, %v385, 0
    %399 = vmatprep.subr.bf16.mxu0 0
    %400 = vmatpush1.bf16.xpose.msra.mxu0 %v394
    %401 = vmatprep.subr.bf16.mxu0 0
    %402 = vmatpush1.bf16.xpose.msra.mxu0 %v397
    %403 = vmatprep.subr.bf16.mxu0 0
    %404 = vmatpush1.bf16.xpose.msra.mxu0 0
    %405 = vmatprep.subr.bf16.mxu0 0
    %406 = vmatpush1.bf16.xpose.msra.mxu0 0
    %407 = vmatprep.subr.bf16.mxu0 0
    %408 = vmatpush1.bf16.xpose.msra.mxu0 0
    %409 = vmatprep.subr.bf16.mxu0 0
    %410 = vmatpush1.bf16.xpose.msra.mxu0 0
    %411 = vmatprep.subr.bf16.mxu0 0
    %412 = vmatpush1.bf16.xpose.msra.mxu0 0
    %413 = vmatprep.subr.bf16.mxu0 0
    %414 = vmatpush1.bf16.xpose.msra.mxu0 0
    %415 = vmatprep.subr.bf16.mxu0 0
    %416 = vmatpush1.bf16.xpose.msra.mxu0 0
    %417 = vmatprep.subr.bf16.mxu0 0
    %418 = vmatpush1.bf16.xpose.msra.mxu0 0
    %419 = vmatprep.subr.bf16.mxu0 0
    %420 = vmatpush1.bf16.xpose.msra.mxu0 0
    %421 = vmatprep.subr.bf16.mxu0 0
    %422 = vmatpush1.bf16.xpose.msra.mxu0 0
    %423 = vmatprep.subr.bf16.mxu0 0
    %424 = vmatpush1.bf16.xpose.msra.mxu0 0
    %425 = vmatprep.subr.bf16.mxu0 0
    %426 = vmatpush1.bf16.xpose.msra.mxu0 0
    %427 = vmatprep.subr.bf16.mxu0 0
    %428 = vmatpush1.bf16.xpose.msra.mxu0 0
    %429 = vmatprep.subr.bf16.mxu0 0
    %430 = vmatpush1.bf16.xpose.msra.mxu0 0
    %431 = vmatprep.mubr.bf16.mxu0 0
    %432 = vmatmul.mubr.bf16.gmra.mrb[0].mxu0 %v388
    %v433 = vpop.f32.mrb[0].mxu0
    %v434 = vadd.f32 %v240, %v433
    %v435 = vpop.f32.mrb[0].mxu0
    %v436 = vpop.f32.mrb[0].mxu0
    %v437 = vadd.f32 %v241, %v436
    %v438 = vpop.f32.mrb[0].mxu0
    %439 = vmatprep.mubr.bf16.mxu0 0
    %440 = vmatmul.mubr.bf16.gmra.mrb[0].mxu0 %v391
    %v441 = vpop.f32.mrb[0].mxu0
    %v442 = vadd.f32 %v242, %v441
    %v443 = vpop.f32.mrb[0].mxu0
    %v444 = vpop.f32.mrb[0].mxu0
    %v445 = vpop.f32.mrb[0].mxu0
    %446 = vdwg.mxu0
    %vm447 = vcmask 195584
    %v448 = vsel %vm447, %v434, -inf
    %449 = vmax.xlane.f32.xlu0 %v448
    %v450 = vpop.xlane.xlu0 %449
    %v451 = vsel %vm447, %v437, -inf
    %452 = vmax.xlane.f32.xlu0 %v451
    %v453 = vpop.xlane.xlu0 %452
    %v454 = vsel %vm447, %v442, -inf
    %455 = vmax.xlane.f32.xlu0 %v454
    %v456 = vpop.xlane.xlu0 %455
    %v457 = vsub.f32 %v434, %v450
    %v458 = vsub.f32 %v437, %v453
    %v459 = vsub.f32 %v442, %v456
    %v460 = vmul.f32 %v457, 1.442695
    %v461 = vpow.pop %v460
    %v462 = vmul.f32 %v458, 1.442695
    %v463 = vpow.pop %v462
    %v464 = vmul.f32 %v459, 1.442695
    %v465 = vpow.pop %v464
    %v466 = vsel %vm447, %v461, 0.0
    %467 = vadd.xlane.f32.xlu0 %v466
    %v468 = vpop.xlane.xlu0 %467
    %v469 = vsel %vm447, %v463, 0.0
    %470 = vadd.xlane.f32.xlu0 %v469
    %v471 = vpop.xlane.xlu0 %470
    %v472 = vsel %vm447, %v465, 0.0
    %473 = vadd.xlane.f32.xlu0 %v472
    %v474 = vpop.xlane.xlu0 %473
    %v475 = vrcp.pop %v468
    %v476 = vrcp.pop %v471
    %v477 = vrcp.pop %v474
    %v478 = vmul.f32 %v461, %v475
    %v479 = vmul.f32 %v463, %v476
    %v480 = vmul.f32 %v465, %v477
    %v481 = vpack.c.bf16 %v479, %v478
    %v482 = vpack.c.bf16 %v480, %v480
    %483 = vrot.lane.b32.xlu0 %v378, 64
    %v484 = vpop.permute.xlu0 %483
    %485 = vrot.lane.b32.xlu0 %v379, 64
    %v486 = vpop.permute.xlu0 %485
    %v489 = vsel %vm447, %v481, 0
    %v492 = vsel %vm447, %v482, 0
    %vm494 = vcmask 1043456
    %v496 = vsel %vm494, %v486, 0
    %498 = vmatprep.subr.bf16.mxu0 0
    %499 = vmatpush1.bf16.msra.mxu0 %v484
    %500 = vmatprep.subr.bf16.mxu0 0
    %501 = vmatpush1.bf16.msra.mxu0 %v496
    %502 = vmatprep.subr.bf16.mxu0 0
    %503 = vmatpush1.bf16.msra.mxu0 0
    %504 = vmatprep.subr.bf16.mxu0 0
    %505 = vmatpush1.bf16.msra.mxu0 0
    %506 = vmatprep.subr.bf16.mxu0 0
    %507 = vmatpush1.bf16.msra.mxu0 0
    %508 = vmatprep.subr.bf16.mxu0 0
    %509 = vmatpush1.bf16.msra.mxu0 0
    %510 = vmatprep.subr.bf16.mxu0 0
    %511 = vmatpush1.bf16.msra.mxu0 0
    %512 = vmatprep.subr.bf16.mxu0 0
    %513 = vmatpush1.bf16.msra.mxu0 0
    %514 = vmatprep.subr.bf16.mxu0 0
    %515 = vmatpush1.bf16.msra.mxu0 0
    %516 = vmatprep.subr.bf16.mxu0 0
    %517 = vmatpush1.bf16.msra.mxu0 0
    %518 = vmatprep.subr.bf16.mxu0 0
    %519 = vmatpush1.bf16.msra.mxu0 0
    %520 = vmatprep.subr.bf16.mxu0 0
    %521 = vmatpush1.bf16.msra.mxu0 0
    %522 = vmatprep.subr.bf16.mxu0 0
    %523 = vmatpush1.bf16.msra.mxu0 0
    %524 = vmatprep.subr.bf16.mxu0 0
    %525 = vmatpush1.bf16.msra.mxu0 0
    %526 = vmatprep.subr.bf16.mxu0 0
    %527 = vmatpush1.bf16.msra.mxu0 0
    %528 = vmatprep.subr.bf16.mxu0 0
    %529 = vmatpush1.bf16.msra.mxu0 0
    %530 = vmatprep.mubr.bf16.mxu0 0
    %531 = vmatmul.mubr.bf16.gmra.mrb[0].mxu0 %v489
    %v532 = vpop.f32.mrb[0].mxu0
    %v533 = vadd.f32 0.0, %v532
    %v534 = vpop.f32.mrb[0].mxu0
    %v535 = vpop.f32.mrb[0].mxu0
    %v536 = vadd.f32 0.0, %v535
    %v537 = vpop.f32.mrb[0].mxu0
    %538 = vmatprep.mubr.bf16.mxu0 0
    %539 = vmatmul.mubr.bf16.gmra.mrb[0].mxu0 %v492
    %v540 = vpop.f32.mrb[0].mxu0
    %v541 = vadd.f32 0.0, %v540
    %v542 = vpop.f32.mrb[0].mxu0
    %v543 = vpop.f32.mrb[0].mxu0
    %v544 = vpop.f32.mrb[0].mxu0
    %545 = vdwg.mxu0
    %v546 = vld [vmem:[%s8] sm:$0xf]
    %v547 = vld [vmem:[%s8 + $0x4] sm:$0xf]
    %v548 = vld [vmem:[%s8 + $0x8] sm:$0xf]
    %v549 = vld [vmem:[%s8 + $0xc] sm:$0xf]
    %v550 = vpack.c.bf16 %v536, %v533
    %v551 = vpack.c.bf16 %v541, %v541
    %v554 = vunpack.c.l.b16 %v546
    %v555 = vunpack.c.l.b16 %v547
    %v556 = vpack.c.b16 %v555, %v554
    %v559 = vsel %vm386, %v550, 0
    %v562 = vsel %vm386, %v551, 0
    %564 = vmatprep.subr.bf16.mxu0 0
    %565 = vmatpush1.bf16.msra.mxu0 %v556
    %566 = vmatprep.subr.bf16.mxu0 0
    %567 = vmatpush1.bf16.msra.mxu0 0
    %568 = vmatprep.subr.bf16.mxu0 0
    %569 = vmatpush1.bf16.msra.mxu0 0
    %570 = vmatprep.subr.bf16.mxu0 0
    %571 = vmatpush1.bf16.msra.mxu0 0
    %572 = vmatprep.subr.bf16.mxu0 0
    %573 = vmatpush1.bf16.msra.mxu0 0
    %574 = vmatprep.subr.bf16.mxu0 0
    %575 = vmatpush1.bf16.msra.mxu0 0
    %576 = vmatprep.subr.bf16.mxu0 0
    %577 = vmatpush1.bf16.msra.mxu0 0
    %578 = vmatprep.subr.bf16.mxu0 0
    %579 = vmatpush1.bf16.msra.mxu0 0
    %580 = vmatprep.subr.bf16.mxu0 0
    %581 = vmatpush1.bf16.msra.mxu0 0
    %582 = vmatprep.subr.bf16.mxu0 0
    %583 = vmatpush1.bf16.msra.mxu0 0
    %584 = vmatprep.subr.bf16.mxu0 0
    %585 = vmatpush1.bf16.msra.mxu0 0
    %586 = vmatprep.subr.bf16.mxu0 0
    %587 = vmatpush1.bf16.msra.mxu0 0
    %588 = vmatprep.subr.bf16.mxu0 0
    %589 = vmatpush1.bf16.msra.mxu0 0
    %590 = vmatprep.subr.bf16.mxu0 0
    %591 = vmatpush1.bf16.msra.mxu0 0
    %592 = vmatprep.subr.bf16.mxu0 0
    %593 = vmatpush1.bf16.msra.mxu0 0
    %594 = vmatprep.subr.bf16.mxu0 0
    %595 = vmatpush1.bf16.msra.mxu0 0
    %596 = vmatprep.mubr.bf16.mxu0 0
    %597 = vmatmul.mubr.bf16.gmra.mrb[0].mxu0 %v559
    %v598 = vpop.f32.mrb[0].mxu0
    %v599 = vadd.f32 0.0, %v598
    %v600 = vpop.f32.mrb[0].mxu0
    %v601 = vpop.f32.mrb[0].mxu0
    %v602 = vadd.f32 0.0, %v601
    %v603 = vpop.f32.mrb[0].mxu0
    %604 = vmatprep.mubr.bf16.mxu0 0
    %605 = vmatmul.mubr.bf16.gmra.mrb[0].mxu0 %v562
    %v606 = vpop.f32.mrb[0].mxu0
    %v607 = vadd.f32 0.0, %v606
    %v608 = vpop.f32.mrb[0].mxu0
    %v609 = vpop.f32.mrb[0].mxu0
    %v610 = vpop.f32.mrb[0].mxu0
    %611 = vdwg.mxu0
    %v612 = vlaneseq
    %v613 = vshrl.u32 %v612, 7
    %v614 = vsub.s32 0, %v613
    %v615 = vrot.slane %v377, %v614
    %v616 = vadd.f32 %v615, %v599
    %v617 = vadd.f32 %v615, %v602
    %v618 = vadd.f32 %v615, %v607
    %619 = vrot.lane.b32.xlu0 %v378, 112
    %v620 = vpop.permute.xlu0 %619
    %621 = vrot.lane.b32.xlu0 %v379, 112
    %v622 = vpop.permute.xlu0 %621
    %623 = vrot.lane.b32.xlu0 %v378, 80
    %v624 = vpop.permute.xlu0 %623
    %625 = vrot.lane.b32.xlu0 %v379, 80
    %v626 = vpop.permute.xlu0 %625
    %v628 = vsel %vm386, %v620, 0
    %v631 = vsel %vm386, %v622, 0
    %v634 = vsel %vm386, %v624, 0
    %v637 = vsel %vm386, %v626, 0
    %639 = vmatprep.subr.bf16.mxu0 0
    %640 = vmatpush1.bf16.xpose.msra.mxu0 %v634
    %641 = vmatprep.subr.bf16.mxu0 0
    %642 = vmatpush1.bf16.xpose.msra.mxu0 %v637
    %643 = vmatprep.subr.bf16.mxu0 0
    %644 = vmatpush1.bf16.xpose.msra.mxu0 0
    %645 = vmatprep.subr.bf16.mxu0 0
    %646 = vmatpush1.bf16.xpose.msra.mxu0 0
    %647 = vmatprep.subr.bf16.mxu0 0
    %648 = vmatpush1.bf16.xpose.msra.mxu0 0
    %649 = vmatprep.subr.bf16.mxu0 0
    %650 = vmatpush1.bf16.xpose.msra.mxu0 0
    %651 = vmatprep.subr.bf16.mxu0 0
    %652 = vmatpush1.bf16.xpose.msra.mxu0 0
    %653 = vmatprep.subr.bf16.mxu0 0
    %654 = vmatpush1.bf16.xpose.msra.mxu0 0
    %655 = vmatprep.subr.bf16.mxu0 0
    %656 = vmatpush1.bf16.xpose.msra.mxu0 0
    %657 = vmatprep.subr.bf16.mxu0 0
    %658 = vmatpush1.bf16.xpose.msra.mxu0 0
    %659 = vmatprep.subr.bf16.mxu0 0
    %660 = vmatpush1.bf16.xpose.msra.mxu0 0
    %661 = vmatprep.subr.bf16.mxu0 0
    %662 = vmatpush1.bf16.xpose.msra.mxu0 0
    %663 = vmatprep.subr.bf16.mxu0 0
    %664 = vmatpush1.bf16.xpose.msra.mxu0 0
    %665 = vmatprep.subr.bf16.mxu0 0
    %666 = vmatpush1.bf16.xpose.msra.mxu0 0
    %667 = vmatprep.subr.bf16.mxu0 0
    %668 = vmatpush1.bf16.xpose.msra.mxu0 0
    %669 = vmatprep.subr.bf16.mxu0 0
    %670 = vmatpush1.bf16.xpose.msra.mxu0 0
    %671 = vmatprep.mubr.bf16.mxu0 0
    %672 = vmatmul.mubr.bf16.gmra.mrb[0].mxu0 %v628
    %v673 = vpop.f32.mrb[0].mxu0
    %v674 = vadd.f32 %v240, %v673
    %v675 = vpop.f32.mrb[0].mxu0
    %v676 = vpop.f32.mrb[0].mxu0
    %v677 = vadd.f32 %v241, %v676
    %v678 = vpop.f32.mrb[0].mxu0
    %679 = vmatprep.mubr.bf16.mxu0 0
    %680 = vmatmul.mubr.bf16.gmra.mrb[0].mxu0 %v631
    %v681 = vpop.f32.mrb[0].mxu0
    %v682 = vadd.f32 %v242, %v681
    %v683 = vpop.f32.mrb[0].mxu0
    %v684 = vpop.f32.mrb[0].mxu0
    %v685 = vpop.f32.mrb[0].mxu0
    %686 = vdwg.mxu0
    %v687 = vsel %vm447, %v674, -inf
    %688 = vmax.xlane.f32.xlu0 %v687
    %v689 = vpop.xlane.xlu0 %688
    %v690 = vsel %vm447, %v677, -inf
    %691 = vmax.xlane.f32.xlu0 %v690
    %v692 = vpop.xlane.xlu0 %691
    %v693 = vsel %vm447, %v682, -inf
    %694 = vmax.xlane.f32.xlu0 %v693
    %v695 = vpop.xlane.xlu0 %694
    %v696 = vsub.f32 %v674, %v689
    %v697 = vsub.f32 %v677, %v692
    %v698 = vsub.f32 %v682, %v695
    %v699 = vmul.f32 %v696, 1.442695
    %v700 = vpow.pop %v699
    %v701 = vmul.f32 %v697, 1.442695
    %v702 = vpow.pop %v701
    %v703 = vmul.f32 %v698, 1.442695
    %v704 = vpow.pop %v703
    %v705 = vsel %vm447, %v700, 0.0
    %706 = vadd.xlane.f32.xlu0 %v705
    %v707 = vpop.xlane.xlu0 %706
    %v708 = vsel %vm447, %v702, 0.0
    %709 = vadd.xlane.f32.xlu0 %v708
    %v710 = vpop.xlane.xlu0 %709
    %v711 = vsel %vm447, %v704, 0.0
    %712 = vadd.xlane.f32.xlu0 %v711
    %v713 = vpop.xlane.xlu0 %712
    %v714 = vrcp.pop %v707
    %v715 = vrcp.pop %v710
    %v716 = vrcp.pop %v713
    %v717 = vmul.f32 %v700, %v714
    %v718 = vmul.f32 %v702, %v715
    %v719 = vmul.f32 %v704, %v716
    %v720 = vpack.c.bf16 %v718, %v717
    %v721 = vpack.c.bf16 %v719, %v719
    %722 = vrot.lane.b32.xlu0 %v378, 48
    %v723 = vpop.permute.xlu0 %722
    %724 = vrot.lane.b32.xlu0 %v379, 48
    %v725 = vpop.permute.xlu0 %724
    %v728 = vsel %vm447, %v720, 0
    %v731 = vsel %vm447, %v721, 0
    %v734 = vsel %vm494, %v725, 0
    %736 = vmatprep.subr.bf16.mxu0 0
    %737 = vmatpush1.bf16.msra.mxu0 %v723
    %738 = vmatprep.subr.bf16.mxu0 0
    %739 = vmatpush1.bf16.msra.mxu0 %v734
    %740 = vmatprep.subr.bf16.mxu0 0
    %741 = vmatpush1.bf16.msra.mxu0 0
    %742 = vmatprep.subr.bf16.mxu0 0
    %743 = vmatpush1.bf16.msra.mxu0 0
    %744 = vmatprep.subr.bf16.mxu0 0
    %745 = vmatpush1.bf16.msra.mxu0 0
    %746 = vmatprep.subr.bf16.mxu0 0
    %747 = vmatpush1.bf16.msra.mxu0 0
    %748 = vmatprep.subr.bf16.mxu0 0
    %749 = vmatpush1.bf16.msra.mxu0 0
    %750 = vmatprep.subr.bf16.mxu0 0
    %751 = vmatpush1.bf16.msra.mxu0 0
    %752 = vmatprep.subr.bf16.mxu0 0
    %753 = vmatpush1.bf16.msra.mxu0 0
    %754 = vmatprep.subr.bf16.mxu0 0
    %755 = vmatpush1.bf16.msra.mxu0 0
    %756 = vmatprep.subr.bf16.mxu0 0
    %757 = vmatpush1.bf16.msra.mxu0 0
    %758 = vmatprep.subr.bf16.mxu0 0
    %759 = vmatpush1.bf16.msra.mxu0 0
    %760 = vmatprep.subr.bf16.mxu0 0
    %761 = vmatpush1.bf16.msra.mxu0 0
    %762 = vmatprep.subr.bf16.mxu0 0
    %763 = vmatpush1.bf16.msra.mxu0 0
    %764 = vmatprep.subr.bf16.mxu0 0
    %765 = vmatpush1.bf16.msra.mxu0 0
    %766 = vmatprep.subr.bf16.mxu0 0
    %767 = vmatpush1.bf16.msra.mxu0 0
    %768 = vmatprep.mubr.bf16.mxu0 0
    %769 = vmatmul.mubr.bf16.gmra.mrb[0].mxu0 %v728
    %v770 = vpop.f32.mrb[0].mxu0
    %v771 = vadd.f32 0.0, %v770
    %v772 = vpop.f32.mrb[0].mxu0
    %v773 = vpop.f32.mrb[0].mxu0
    %v774 = vadd.f32 0.0, %v773
    %v775 = vpop.f32.mrb[0].mxu0
    %776 = vmatprep.mubr.bf16.mxu0 0
    %777 = vmatmul.mubr.bf16.gmra.mrb[0].mxu0 %v731
    %v778 = vpop.f32.mrb[0].mxu0
    %v779 = vadd.f32 0.0, %v778
    %v780 = vpop.f32.mrb[0].mxu0
    %v781 = vpop.f32.mrb[0].mxu0
    %v782 = vpop.f32.mrb[0].mxu0
    %783 = vdwg.mxu0
    %v784 = vpack.c.bf16 %v774, %v771
    %v785 = vpack.c.bf16 %v779, %v779
    %v788 = vunpack.c.l.b16 %v548
    %v789 = vunpack.c.l.b16 %v549
    %v790 = vpack.c.b16 %v789, %v788
    %v793 = vsel %vm386, %v784, 0
    %v796 = vsel %vm386, %v785, 0
    %798 = vmatprep.subr.bf16.mxu0 0
    %799 = vmatpush1.bf16.msra.mxu0 %v790
    %800 = vmatprep.subr.bf16.mxu0 0
    %801 = vmatpush1.bf16.msra.mxu0 0
    %802 = vmatprep.subr.bf16.mxu0 0
    %803 = vmatpush1.bf16.msra.mxu0 0
    %804 = vmatprep.subr.bf16.mxu0 0
    %805 = vmatpush1.bf16.msra.mxu0 0
    %806 = vmatprep.subr.bf16.mxu0 0
    %807 = vmatpush1.bf16.msra.mxu0 0
    %808 = vmatprep.subr.bf16.mxu0 0
    %809 = vmatpush1.bf16.msra.mxu0 0
    %810 = vmatprep.subr.bf16.mxu0 0
    %811 = vmatpush1.bf16.msra.mxu0 0
    %812 = vmatprep.subr.bf16.mxu0 0
    %813 = vmatpush1.bf16.msra.mxu0 0
    %814 = vmatprep.subr.bf16.mxu0 0
    %815 = vmatpush1.bf16.msra.mxu0 0
    %816 = vmatprep.subr.bf16.mxu0 0
    %817 = vmatpush1.bf16.msra.mxu0 0
    %818 = vmatprep.subr.bf16.mxu0 0
    %819 = vmatpush1.bf16.msra.mxu0 0
    %820 = vmatprep.subr.bf16.mxu0 0
    %821 = vmatpush1.bf16.msra.mxu0 0
    %822 = vmatprep.subr.bf16.mxu0 0
    %823 = vmatpush1.bf16.msra.mxu0 0
    %824 = vmatprep.subr.bf16.mxu0 0
    %825 = vmatpush1.bf16.msra.mxu0 0
    %826 = vmatprep.subr.bf16.mxu0 0
    %827 = vmatpush1.bf16.msra.mxu0 0
    %828 = vmatprep.subr.bf16.mxu0 0
    %829 = vmatpush1.bf16.msra.mxu0 0
    %830 = vmatprep.mubr.bf16.mxu0 0
    %831 = vmatmul.mubr.bf16.gmra.mrb[0].mxu0 %v793
    %v832 = vpop.f32.mrb[0].mxu0
    %v833 = vadd.f32 0.0, %v832
    %v834 = vpop.f32.mrb[0].mxu0
    %v835 = vpop.f32.mrb[0].mxu0
    %v836 = vadd.f32 0.0, %v835
    %v837 = vpop.f32.mrb[0].mxu0
    %838 = vmatprep.mubr.bf16.mxu0 0
    %839 = vmatmul.mubr.bf16.gmra.mrb[0].mxu0 %v796
    %v840 = vpop.f32.mrb[0].mxu0
    %v841 = vadd.f32 0.0, %v840
    %v842 = vpop.f32.mrb[0].mxu0
    %v843 = vpop.f32.mrb[0].mxu0
    %v844 = vpop.f32.mrb[0].mxu0
    %845 = vdwg.mxu0
    %v846 = vadd.f32 %v616, %v833
    %v847 = vadd.f32 %v617, %v836
    %v848 = vadd.f32 %v618, %v841
    %v849 = vadd.f32 %v227, %v846
    %v850 = vadd.f32 %v230, %v847
    %v851 = vadd.f32 %v235, %v848
    %v852 = vld [vmem:[%s10] sm:$0x1]
    %v853 = vld [vmem:[%s11] sm:$0x1]
    %v854 = vsel %vm245, %v849, 0.0
    %855 = vadd.xlane.f32.xlu0 %v854
    %v856 = vpop.xlane.xlu0 %855
    %v857 = vsel %vm245, %v850, 0.0
    %858 = vadd.xlane.f32.xlu0 %v857
    %v859 = vpop.xlane.xlu0 %858
    %v860 = vsel %vm245, %v851, 0.0
    %861 = vadd.xlane.f32.xlu0 %v860
    %v862 = vpop.xlane.xlu0 %861
    %v863 = vmul.f32 %v856, %v255
    %v864 = vmul.f32 %v859, %v255
    %v865 = vmul.f32 %v862, %v255
    %v866 = vsub.f32 %v849, %v863
    %v867 = vsub.f32 %v850, %v864
    %v868 = vsub.f32 %v851, %v865
    %v869 = vmul.f32 %v866, %v866
    %v870 = vmul.f32 %v867, %v867
    %v871 = vmul.f32 %v868, %v868
    %v872 = vsel %vm245, %v869, 0.0
    %873 = vadd.xlane.f32.xlu0 %v872
    %v874 = vpop.xlane.xlu0 %873
    %v875 = vsel %vm245, %v870, 0.0
    %876 = vadd.xlane.f32.xlu0 %v875
    %v877 = vpop.xlane.xlu0 %876
    %v878 = vsel %vm245, %v871, 0.0
    %879 = vadd.xlane.f32.xlu0 %v878
    %v880 = vpop.xlane.xlu0 %879
    %v881 = vmul.f32 %v874, %v255
    %v882 = vmul.f32 %v877, %v255
    %v883 = vmul.f32 %v880, %v255
    %v884 = vadd.f32 %v881, 1e-12
    %v885 = vadd.f32 %v882, 1e-12
    %v886 = vadd.f32 %v883, 1e-12
    %v887 = vrsqrt.pop %v884
    %v888 = vrsqrt.pop %v885
    %v889 = vrsqrt.pop %v886
    %v890 = vmul.f32 %v866, %v887
    %v891 = vmul.f32 %v867, %v888
    %v892 = vmul.f32 %v868, %v889
    %v893 = vlaneseq
    %v894 = vshrl.u32 %v893, 7
    %v895 = vsub.s32 0, %v894
    %v896 = vrot.slane %v852, %v895
    %v897 = vmul.f32 %v890, %v896
    %v898 = vmul.f32 %v891, %v896
    %v899 = vmul.f32 %v892, %v896
    %v900 = vlaneseq
    %v901 = vshrl.u32 %v900, 7
    %v902 = vsub.s32 0, %v901
    %v903 = vrot.slane %v853, %v902
    %v904 = vadd.f32 %v897, %v903
    %v905 = vadd.f32 %v898, %v903
    %v906 = vadd.f32 %v899, %v903
    %v907 = vld [vmem:[%s12] sm:$0xf]
    %v908 = vld [vmem:[%s12 + $0x4] sm:$0xf]
    %v909 = vld [vmem:[%s12 + $0x8] sm:$0xf]
    %v910 = vld [vmem:[%s12 + $0xc] sm:$0xf]
    %v911 = vpack.c.bf16 %v905, %v904
    %v912 = vpack.c.bf16 %v906, %v906
    %v913 = vld [vmem:[%s13] sm:$0x1]
    %v914 = vlaneseq
    %v915 = vshrl.u32 %v914, 7
    %v916 = vsub.s32 0, %v915
    %v917 = vrot.slane %v913, %v916
    %v922 = vunpack.c.l.b16 %v907
    %v923 = vunpack.c.l.b16 %v908
    %v924 = vunpack.c.l.b16 %v909
    %v925 = vunpack.c.l.b16 %v910
    %v926 = vpack.c.b16 %v923, %v922
    %v927 = vpack.c.b16 %v925, %v924
    %v931 = vsel %vm245, %v911, 0
    %v934 = vsel %vm245, %v912, 0
    %936 = vmatprep.subr.bf16.mxu0 0
    %937 = vmatpush1.bf16.msra.mxu0 %v926
    %938 = vmatprep.subr.bf16.mxu0 0
    %939 = vmatpush1.bf16.msra.mxu0 %v927
    %940 = vmatprep.subr.bf16.mxu0 0
    %941 = vmatpush1.bf16.msra.mxu0 0
    %942 = vmatprep.subr.bf16.mxu0 0
    %943 = vmatpush1.bf16.msra.mxu0 0
    %944 = vmatprep.subr.bf16.mxu0 0
    %945 = vmatpush1.bf16.msra.mxu0 0
    %946 = vmatprep.subr.bf16.mxu0 0
    %947 = vmatpush1.bf16.msra.mxu0 0
    %948 = vmatprep.subr.bf16.mxu0 0
    %949 = vmatpush1.bf16.msra.mxu0 0
    %950 = vmatprep.subr.bf16.mxu0 0
    %951 = vmatpush1.bf16.msra.mxu0 0
    %952 = vmatprep.subr.bf16.mxu0 0
    %953 = vmatpush1.bf16.msra.mxu0 0
    %954 = vmatprep.subr.bf16.mxu0 0
    %955 = vmatpush1.bf16.msra.mxu0 0
    %956 = vmatprep.subr.bf16.mxu0 0
    %957 = vmatpush1.bf16.msra.mxu0 0
    %958 = vmatprep.subr.bf16.mxu0 0
    %959 = vmatpush1.bf16.msra.mxu0 0
    %960 = vmatprep.subr.bf16.mxu0 0
    %961 = vmatpush1.bf16.msra.mxu0 0
    %962 = vmatprep.subr.bf16.mxu0 0
    %963 = vmatpush1.bf16.msra.mxu0 0
    %964 = vmatprep.subr.bf16.mxu0 0
    %965 = vmatpush1.bf16.msra.mxu0 0
    %966 = vmatprep.subr.bf16.mxu0 0
    %967 = vmatpush1.bf16.msra.mxu0 0
    %968 = vmatprep.mubr.bf16.mxu0 0
    %969 = vmatmul.mubr.bf16.gmra.mrb[0].mxu0 %v931
    %v970 = vpop.f32.mrb[0].mxu0
    %v971 = vadd.f32 %v917, %v970
    %v972 = vpop.f32.mrb[0].mxu0
    %v973 = vpop.f32.mrb[0].mxu0
    %v974 = vadd.f32 %v917, %v973
    %v975 = vpop.f32.mrb[0].mxu0
    %976 = vmatprep.mubr.bf16.mxu0 0
    %977 = vmatmul.mubr.bf16.gmra.mrb[0].mxu0 %v934
    %v978 = vpop.f32.mrb[0].mxu0
    %v979 = vadd.f32 %v917, %v978
    %v980 = vpop.f32.mrb[0].mxu0
    %v981 = vpop.f32.mrb[0].mxu0
    %v982 = vpop.f32.mrb[0].mxu0
    %983 = vdwg.mxu0
    %v984 = vmul.f32 %v971, 0.5
    %v985 = vmul.f32 %v974, 0.5
    %v986 = vmul.f32 %v979, 0.5
    %v987 = vmul.f32 %v971, 0.70710677
    %v988 = vmul.f32 %v974, 0.70710677
    %v989 = vmul.f32 %v979, 0.70710677
    %v990 = verf.f32.pop %v987
    %v991 = verf.f32.pop %v988
    %v992 = verf.f32.pop %v989
    %v993 = vadd.f32 %v990, 1.0
    %v994 = vadd.f32 %v991, 1.0
    %v995 = vadd.f32 %v992, 1.0
    %v996 = vmul.f32 %v984, %v993
    %v997 = vmul.f32 %v985, %v994
    %v998 = vmul.f32 %v986, %v995
    %v999 = vld [vmem:[%s14] sm:$0xf]
    %v1000 = vld [vmem:[%s14 + $0x4] sm:$0xf]
    %v1001 = vld [vmem:[%s14 + $0x8] sm:$0xf]
    %v1002 = vld [vmem:[%s14 + $0xc] sm:$0xf]
    %v1003 = vld [vmem:[%s14 + $0x10] sm:$0xf]
    %v1004 = vld [vmem:[%s14 + $0x14] sm:$0xf]
    %v1005 = vld [vmem:[%s14 + $0x18] sm:$0xf]
    %v1006 = vld [vmem:[%s14 + $0x1c] sm:$0xf]
    %v1007 = vpack.c.bf16 %v997, %v996
    %v1008 = vpack.c.bf16 %v998, %v998
    %v1017 = vunpack.c.l.b16 %v999
    %v1018 = vunpack.c.l.b16 %v1000
    %v1019 = vunpack.c.l.b16 %v1001
    %v1020 = vunpack.c.l.b16 %v1002
    %v1021 = vunpack.c.l.b16 %v1003
    %v1022 = vunpack.c.l.b16 %v1004
    %v1023 = vunpack.c.l.b16 %v1005
    %v1024 = vunpack.c.l.b16 %v1006
    %v1025 = vpack.c.b16 %v1018, %v1017
    %v1026 = vpack.c.b16 %v1020, %v1019
    %v1027 = vpack.c.b16 %v1022, %v1021
    %v1028 = vpack.c.b16 %v1024, %v1023
    %v1034 = vsel %vm185, %v1007, 0
    %v1037 = vsel %vm185, %v1008, 0
    %1039 = vmatprep.subr.bf16.mxu0 0
    %1040 = vmatpush1.bf16.msra.mxu0 %v1025
    %1041 = vmatprep.subr.bf16.mxu0 0
    %1042 = vmatpush1.bf16.msra.mxu0 %v1026
    %1043 = vmatprep.subr.bf16.mxu0 0
    %1044 = vmatpush1.bf16.msra.mxu0 %v1027
    %1045 = vmatprep.subr.bf16.mxu0 0
    %1046 = vmatpush1.bf16.msra.mxu0 %v1028
    %1047 = vmatprep.subr.bf16.mxu0 0
    %1048 = vmatpush1.bf16.msra.mxu0 0
    %1049 = vmatprep.subr.bf16.mxu0 0
    %1050 = vmatpush1.bf16.msra.mxu0 0
    %1051 = vmatprep.subr.bf16.mxu0 0
    %1052 = vmatpush1.bf16.msra.mxu0 0
    %1053 = vmatprep.subr.bf16.mxu0 0
    %1054 = vmatpush1.bf16.msra.mxu0 0
    %1055 = vmatprep.subr.bf16.mxu0 0
    %1056 = vmatpush1.bf16.msra.mxu0 0
    %1057 = vmatprep.subr.bf16.mxu0 0
    %1058 = vmatpush1.bf16.msra.mxu0 0
    %1059 = vmatprep.subr.bf16.mxu0 0
    %1060 = vmatpush1.bf16.msra.mxu0 0
    %1061 = vmatprep.subr.bf16.mxu0 0
    %1062 = vmatpush1.bf16.msra.mxu0 0
    %1063 = vmatprep.subr.bf16.mxu0 0
    %1064 = vmatpush1.bf16.msra.mxu0 0
    %1065 = vmatprep.subr.bf16.mxu0 0
    %1066 = vmatpush1.bf16.msra.mxu0 0
    %1067 = vmatprep.subr.bf16.mxu0 0
    %1068 = vmatpush1.bf16.msra.mxu0 0
    %1069 = vmatprep.subr.bf16.mxu0 0
    %1070 = vmatpush1.bf16.msra.mxu0 0
    %1071 = vmatprep.mubr.bf16.mxu0 0
    %1072 = vmatmul.mubr.bf16.gmra.mrb[0].mxu0 %v1034
    %v1073 = vpop.f32.mrb[0].mxu0
    %v1074 = vadd.f32 0.0, %v1073
    %v1075 = vpop.f32.mrb[0].mxu0
    %v1076 = vpop.f32.mrb[0].mxu0
    %v1077 = vadd.f32 0.0, %v1076
    %v1078 = vpop.f32.mrb[0].mxu0
    %1079 = vmatprep.mubr.bf16.mxu0 0
    %1080 = vmatmul.mubr.bf16.gmra.mrb[0].mxu0 %v1037
    %v1081 = vpop.f32.mrb[0].mxu0
    %v1082 = vadd.f32 0.0, %v1081
    %v1083 = vpop.f32.mrb[0].mxu0
    %v1084 = vpop.f32.mrb[0].mxu0
    %v1085 = vpop.f32.mrb[0].mxu0
    %1086 = vdwg.mxu0
    %v1087 = vadd.f32 %v849, %v1074
    %v1088 = vadd.f32 %v850, %v1077
    %v1089 = vadd.f32 %v851, %v1082
    %v1090 = vld [vmem:[%s15] sm:$0x1]
    %v1091 = vlaneseq
    %v1092 = vshrl.u32 %v1091, 7
    %v1093 = vsub.s32 0, %v1092
    %v1094 = vrot.slane %v1090, %v1093
    %v1095 = vadd.f32 %v1087, %v1094
    %v1096 = vadd.f32 %v1088, %v1094
    %v1097 = vadd.f32 %v1089, %v1094
    %v1098 = vld [vmem:[%s4 + $0x1] sm:$0x1]
    %v1099 = vld [vmem:[%s5 + $0x1] sm:$0x1]
    %v1100 = vsel %vm245, %v1095, 0.0
    %1101 = vadd.xlane.f32.xlu0 %v1100
    %v1102 = vpop.xlane.xlu0 %1101
    %v1103 = vsel %vm245, %v1096, 0.0
    %1104 = vadd.xlane.f32.xlu0 %v1103
    %v1105 = vpop.xlane.xlu0 %1104
    %v1106 = vsel %vm245, %v1097, 0.0
    %1107 = vadd.xlane.f32.xlu0 %v1106
    %v1108 = vpop.xlane.xlu0 %1107
    %v1109 = vmul.f32 %v1102, %v255
    %v1110 = vmul.f32 %v1105, %v255
    %v1111 = vmul.f32 %v1108, %v255
    %v1112 = vsub.f32 %v1095, %v1109
    %v1113 = vsub.f32 %v1096, %v1110
    %v1114 = vsub.f32 %v1097, %v1111
    %v1115 = vmul.f32 %v1112, %v1112
    %v1116 = vmul.f32 %v1113, %v1113
    %v1117 = vmul.f32 %v1114, %v1114
    %v1118 = vsel %vm245, %v1115, 0.0
    %1119 = vadd.xlane.f32.xlu0 %v1118
    %v1120 = vpop.xlane.xlu0 %1119
    %v1121 = vsel %vm245, %v1116, 0.0
    %1122 = vadd.xlane.f32.xlu0 %v1121
    %v1123 = vpop.xlane.xlu0 %1122
    %v1124 = vsel %vm245, %v1117, 0.0
    %1125 = vadd.xlane.f32.xlu0 %v1124
    %v1126 = vpop.xlane.xlu0 %1125
    %v1127 = vmul.f32 %v1120, %v255
    %v1128 = vmul.f32 %v1123, %v255
    %v1129 = vmul.f32 %v1126, %v255
    %v1130 = vadd.f32 %v1127, 1e-12
    %v1131 = vadd.f32 %v1128, 1e-12
    %v1132 = vadd.f32 %v1129, 1e-12
    %v1133 = vrsqrt.pop %v1130
    %v1134 = vrsqrt.pop %v1131
    %v1135 = vrsqrt.pop %v1132
    %v1136 = vmul.f32 %v1112, %v1133
    %v1137 = vmul.f32 %v1113, %v1134
    %v1138 = vmul.f32 %v1114, %v1135
    %v1139 = vlaneseq
    %v1140 = vshrl.u32 %v1139, 7
    %v1141 = vsub.s32 0, %v1140
    %v1142 = vrot.slane %v1098, %v1141
    %v1143 = vmul.f32 %v1136, %v1142
    %v1144 = vmul.f32 %v1137, %v1142
    %v1145 = vmul.f32 %v1138, %v1142
    %v1146 = vlaneseq
    %v1147 = vshrl.u32 %v1146, 7
    %v1148 = vsub.s32 0, %v1147
    %v1149 = vrot.slane %v1099, %v1148
    %v1150 = vadd.f32 %v1143, %v1149
    %v1151 = vadd.f32 %v1144, %v1149
    %v1152 = vadd.f32 %v1145, %v1149
    %s1153 = scalar_lea.vmem %s6, 16
    %v1154 = vld [vmem:[%s1153] sm:$0xf]
    %v1155 = vld [vmem:[%s1153 + $0x4] sm:$0xf]
    %v1156 = vld [vmem:[%s1153 + $0x8] sm:$0xf]
    %v1157 = vld [vmem:[%s1153 + $0xc] sm:$0xf]
    %v1158 = vpack.c.bf16 %v1151, %v1150
    %v1159 = vpack.c.bf16 %v1152, %v1152
    %v1160 = vld [vmem:[%s7 + $0x1] sm:$0x1]
    %v1161 = vlaneseq
    %v1162 = vshrl.u32 %v1161, 7
    %v1163 = vsub.s32 0, %v1162
    %v1164 = vrot.slane %v1160, %v1163
    %v1169 = vunpack.c.l.b16 %v1154
    %v1170 = vunpack.c.l.b16 %v1155
    %v1171 = vunpack.c.l.b16 %v1156
    %v1172 = vunpack.c.l.b16 %v1157
    %v1173 = vpack.c.b16 %v1170, %v1169
    %v1174 = vpack.c.b16 %v1172, %v1171
    %v1178 = vsel %vm245, %v1158, 0
    %v1181 = vsel %vm245, %v1159, 0
    %1183 = vmatprep.subr.bf16.mxu0 0
    %1184 = vmatpush1.bf16.msra.mxu0 %v1173
    %1185 = vmatprep.subr.bf16.mxu0 0
    %1186 = vmatpush1.bf16.msra.mxu0 %v1174
    %1187 = vmatprep.subr.bf16.mxu0 0
    %1188 = vmatpush1.bf16.msra.mxu0 0
    %1189 = vmatprep.subr.bf16.mxu0 0
    %1190 = vmatpush1.bf16.msra.mxu0 0
    %1191 = vmatprep.subr.bf16.mxu0 0
    %1192 = vmatpush1.bf16.msra.mxu0 0
    %1193 = vmatprep.subr.bf16.mxu0 0
    %1194 = vmatpush1.bf16.msra.mxu0 0
    %1195 = vmatprep.subr.bf16.mxu0 0
    %1196 = vmatpush1.bf16.msra.mxu0 0
    %1197 = vmatprep.subr.bf16.mxu0 0
    %1198 = vmatpush1.bf16.msra.mxu0 0
    %1199 = vmatprep.subr.bf16.mxu0 0
    %1200 = vmatpush1.bf16.msra.mxu0 0
    %1201 = vmatprep.subr.bf16.mxu0 0
    %1202 = vmatpush1.bf16.msra.mxu0 0
    %1203 = vmatprep.subr.bf16.mxu0 0
    %1204 = vmatpush1.bf16.msra.mxu0 0
    %1205 = vmatprep.subr.bf16.mxu0 0
    %1206 = vmatpush1.bf16.msra.mxu0 0
    %1207 = vmatprep.subr.bf16.mxu0 0
    %1208 = vmatpush1.bf16.msra.mxu0 0
    %1209 = vmatprep.subr.bf16.mxu0 0
    %1210 = vmatpush1.bf16.msra.mxu0 0
    %1211 = vmatprep.subr.bf16.mxu0 0
    %1212 = vmatpush1.bf16.msra.mxu0 0
    %1213 = vmatprep.subr.bf16.mxu0 0
    %1214 = vmatpush1.bf16.msra.mxu0 0
    %1215 = vmatprep.mubr.bf16.mxu0 0
    %1216 = vmatmul.mubr.bf16.gmra.mrb[0].mxu0 %v1178
    %v1217 = vpop.f32.mrb[0].mxu0
    %v1218 = vadd.f32 %v1164, %v1217
    %v1219 = vpop.f32.mrb[0].mxu0
    %v1220 = vpop.f32.mrb[0].mxu0
    %v1221 = vadd.f32 %v1164, %v1220
    %v1222 = vpop.f32.mrb[0].mxu0
    %1223 = vmatprep.mubr.bf16.mxu0 0
    %1224 = vmatmul.mubr.bf16.gmra.mrb[0].mxu0 %v1181
    %v1225 = vpop.f32.mrb[0].mxu0
    %v1226 = vadd.f32 %v1164, %v1225
    %v1227 = vpop.f32.mrb[0].mxu0
    %v1228 = vpop.f32.mrb[0].mxu0
    %v1229 = vpop.f32.mrb[0].mxu0
    %1230 = vdwg.mxu0
    %v1231 = vld [vmem:[%s9 + $0x1] sm:$0x1]
    %v1232 = vpack.c.bf16 %v1221, %v1218
    %v1233 = vpack.c.bf16 %v1226, %v1226
    %1236 = vrot.lane.b32.xlu0 %v1232, 96
    %v1237 = vpop.permute.xlu0 %1236
    %1238 = vrot.lane.b32.xlu0 %v1233, 96
    %v1239 = vpop.permute.xlu0 %1238
    %v1241 = vsel %vm386, %v1232, 0
    %v1244 = vsel %vm386, %v1233, 0
    %v1247 = vsel %vm386, %v1237, 0
    %v1250 = vsel %vm386, %v1239, 0
    %1252 = vmatprep.subr.bf16.mxu0 0
    %1253 = vmatpush1.bf16.xpose.msra.mxu0 %v1247
    %1254 = vmatprep.subr.bf16.mxu0 0
    %1255 = vmatpush1.bf16.xpose.msra.mxu0 %v1250
    %1256 = vmatprep.subr.bf16.mxu0 0
    %1257 = vmatpush1.bf16.xpose.msra.mxu0 0
    %1258 = vmatprep.subr.bf16.mxu0 0
    %1259 = vmatpush1.bf16.xpose.msra.mxu0 0
    %1260 = vmatprep.subr.bf16.mxu0 0
    %1261 = vmatpush1.bf16.xpose.msra.mxu0 0
    %1262 = vmatprep.subr.bf16.mxu0 0
    %1263 = vmatpush1.bf16.xpose.msra.mxu0 0
    %1264 = vmatprep.subr.bf16.mxu0 0
    %1265 = vmatpush1.bf16.xpose.msra.mxu0 0
    %1266 = vmatprep.subr.bf16.mxu0 0
    %1267 = vmatpush1.bf16.xpose.msra.mxu0 0
    %1268 = vmatprep.subr.bf16.mxu0 0
    %1269 = vmatpush1.bf16.xpose.msra.mxu0 0
    %1270 = vmatprep.subr.bf16.mxu0 0
    %1271 = vmatpush1.bf16.xpose.msra.mxu0 0
    %1272 = vmatprep.subr.bf16.mxu0 0
    %1273 = vmatpush1.bf16.xpose.msra.mxu0 0
    %1274 = vmatprep.subr.bf16.mxu0 0
    %1275 = vmatpush1.bf16.xpose.msra.mxu0 0
    %1276 = vmatprep.subr.bf16.mxu0 0
    %1277 = vmatpush1.bf16.xpose.msra.mxu0 0
    %1278 = vmatprep.subr.bf16.mxu0 0
    %1279 = vmatpush1.bf16.xpose.msra.mxu0 0
    %1280 = vmatprep.subr.bf16.mxu0 0
    %1281 = vmatpush1.bf16.xpose.msra.mxu0 0
    %1282 = vmatprep.subr.bf16.mxu0 0
    %1283 = vmatpush1.bf16.xpose.msra.mxu0 0
    %1284 = vmatprep.mubr.bf16.mxu0 0
    %1285 = vmatmul.mubr.bf16.gmra.mrb[0].mxu0 %v1241
    %v1286 = vpop.f32.mrb[0].mxu0
    %v1287 = vadd.f32 %v240, %v1286
    %v1288 = vpop.f32.mrb[0].mxu0
    %v1289 = vpop.f32.mrb[0].mxu0
    %v1290 = vadd.f32 %v241, %v1289
    %v1291 = vpop.f32.mrb[0].mxu0
    %1292 = vmatprep.mubr.bf16.mxu0 0
    %1293 = vmatmul.mubr.bf16.gmra.mrb[0].mxu0 %v1244
    %v1294 = vpop.f32.mrb[0].mxu0
    %v1295 = vadd.f32 %v242, %v1294
    %v1296 = vpop.f32.mrb[0].mxu0
    %v1297 = vpop.f32.mrb[0].mxu0
    %v1298 = vpop.f32.mrb[0].mxu0
    %1299 = vdwg.mxu0
    %v1300 = vsel %vm447, %v1287, -inf
    %1301 = vmax.xlane.f32.xlu0 %v1300
    %v1302 = vpop.xlane.xlu0 %1301
    %v1303 = vsel %vm447, %v1290, -inf
    %1304 = vmax.xlane.f32.xlu0 %v1303
    %v1305 = vpop.xlane.xlu0 %1304
    %v1306 = vsel %vm447, %v1295, -inf
    %1307 = vmax.xlane.f32.xlu0 %v1306
    %v1308 = vpop.xlane.xlu0 %1307
    %v1309 = vsub.f32 %v1287, %v1302
    %v1310 = vsub.f32 %v1290, %v1305
    %v1311 = vsub.f32 %v1295, %v1308
    %v1312 = vmul.f32 %v1309, 1.442695
    %v1313 = vpow.pop %v1312
    %v1314 = vmul.f32 %v1310, 1.442695
    %v1315 = vpow.pop %v1314
    %v1316 = vmul.f32 %v1311, 1.442695
    %v1317 = vpow.pop %v1316
    %v1318 = vsel %vm447, %v1313, 0.0
    %1319 = vadd.xlane.f32.xlu0 %v1318
    %v1320 = vpop.xlane.xlu0 %1319
    %v1321 = vsel %vm447, %v1315, 0.0
    %1322 = vadd.xlane.f32.xlu0 %v1321
    %v1323 = vpop.xlane.xlu0 %1322
    %v1324 = vsel %vm447, %v1317, 0.0
    %1325 = vadd.xlane.f32.xlu0 %v1324
    %v1326 = vpop.xlane.xlu0 %1325
    %v1327 = vrcp.pop %v1320
    %v1328 = vrcp.pop %v1323
    %v1329 = vrcp.pop %v1326
    %v1330 = vmul.f32 %v1313, %v1327
    %v1331 = vmul.f32 %v1315, %v1328
    %v1332 = vmul.f32 %v1317, %v1329
    %v1333 = vpack.c.bf16 %v1331, %v1330
    %v1334 = vpack.c.bf16 %v1332, %v1332
    %1335 = vrot.lane.b32.xlu0 %v1232, 64
    %v1336 = vpop.permute.xlu0 %1335
    %1337 = vrot.lane.b32.xlu0 %v1233, 64
    %v1338 = vpop.permute.xlu0 %1337
    %v1341 = vsel %vm447, %v1333, 0
    %v1344 = vsel %vm447, %v1334, 0
    %v1347 = vsel %vm494, %v1338, 0
    %1349 = vmatprep.subr.bf16.mxu0 0
    %1350 = vmatpush1.bf16.msra.mxu0 %v1336
    %1351 = vmatprep.subr.bf16.mxu0 0
    %1352 = vmatpush1.bf16.msra.mxu0 %v1347
    %1353 = vmatprep.subr.bf16.mxu0 0
    %1354 = vmatpush1.bf16.msra.mxu0 0
    %1355 = vmatprep.subr.bf16.mxu0 0
    %1356 = vmatpush1.bf16.msra.mxu0 0
    %1357 = vmatprep.subr.bf16.mxu0 0
    %1358 = vmatpush1.bf16.msra.mxu0 0
    %1359 = vmatprep.subr.bf16.mxu0 0
    %1360 = vmatpush1.bf16.msra.mxu0 0
    %1361 = vmatprep.subr.bf16.mxu0 0
    %1362 = vmatpush1.bf16.msra.mxu0 0
    %1363 = vmatprep.subr.bf16.mxu0 0
    %1364 = vmatpush1.bf16.msra.mxu0 0
    %1365 = vmatprep.subr.bf16.mxu0 0
    %1366 = vmatpush1.bf16.msra.mxu0 0
    %1367 = vmatprep.subr.bf16.mxu0 0
    %1368 = vmatpush1.bf16.msra.mxu0 0
    %1369 = vmatprep.subr.bf16.mxu0 0
    %1370 = vmatpush1.bf16.msra.mxu0 0
    %1371 = vmatprep.subr.bf16.mxu0 0
    %1372 = vmatpush1.bf16.msra.mxu0 0
    %1373 = vmatprep.subr.bf16.mxu0 0
    %1374 = vmatpush1.bf16.msra.mxu0 0
    %1375 = vmatprep.subr.bf16.mxu0 0
    %1376 = vmatpush1.bf16.msra.mxu0 0
    %1377 = vmatprep.subr.bf16.mxu0 0
    %1378 = vmatpush1.bf16.msra.mxu0 0
    %1379 = vmatprep.subr.bf16.mxu0 0
    %1380 = vmatpush1.bf16.msra.mxu0 0
    %1381 = vmatprep.mubr.bf16.mxu0 0
    %1382 = vmatmul.mubr.bf16.gmra.mrb[0].mxu0 %v1341
    %v1383 = vpop.f32.mrb[0].mxu0
    %v1384 = vadd.f32 0.0, %v1383
    %v1385 = vpop.f32.mrb[0].mxu0
    %v1386 = vpop.f32.mrb[0].mxu0
    %v1387 = vadd.f32 0.0, %v1386
    %v1388 = vpop.f32.mrb[0].mxu0
    %1389 = vmatprep.mubr.bf16.mxu0 0
    %1390 = vmatmul.mubr.bf16.gmra.mrb[0].mxu0 %v1344
    %v1391 = vpop.f32.mrb[0].mxu0
    %v1392 = vadd.f32 0.0, %v1391
    %v1393 = vpop.f32.mrb[0].mxu0
    %v1394 = vpop.f32.mrb[0].mxu0
    %v1395 = vpop.f32.mrb[0].mxu0
    %1396 = vdwg.mxu0
    %s1397 = scalar_lea.vmem %s8, 16
    %v1398 = vld [vmem:[%s1397] sm:$0xf]
    %v1399 = vld [vmem:[%s1397 + $0x4] sm:$0xf]
    %v1400 = vld [vmem:[%s1397 + $0x8] sm:$0xf]
    %v1401 = vld [vmem:[%s1397 + $0xc] sm:$0xf]
    %v1402 = vpack.c.bf16 %v1387, %v1384
    %v1403 = vpack.c.bf16 %v1392, %v1392
    %v1406 = vunpack.c.l.b16 %v1398
    %v1407 = vunpack.c.l.b16 %v1399
    %v1408 = vpack.c.b16 %v1407, %v1406
    %v1411 = vsel %vm386, %v1402, 0
    %v1414 = vsel %vm386, %v1403, 0
    %1416 = vmatprep.subr.bf16.mxu0 0
    %1417 = vmatpush1.bf16.msra.mxu0 %v1408
    %1418 = vmatprep.subr.bf16.mxu0 0
    %1419 = vmatpush1.bf16.msra.mxu0 0
    %1420 = vmatprep.subr.bf16.mxu0 0
    %1421 = vmatpush1.bf16.msra.mxu0 0
    %1422 = vmatprep.subr.bf16.mxu0 0
    %1423 = vmatpush1.bf16.msra.mxu0 0
    %1424 = vmatprep.subr.bf16.mxu0 0
    %1425 = vmatpush1.bf16.msra.mxu0 0
    %1426 = vmatprep.subr.bf16.mxu0 0
    %1427 = vmatpush1.bf16.msra.mxu0 0
    %1428 = vmatprep.subr.bf16.mxu0 0
    %1429 = vmatpush1.bf16.msra.mxu0 0
    %1430 = vmatprep.subr.bf16.mxu0 0
    %1431 = vmatpush1.bf16.msra.mxu0 0
    %1432 = vmatprep.subr.bf16.mxu0 0
    %1433 = vmatpush1.bf16.msra.mxu0 0
    %1434 = vmatprep.subr.bf16.mxu0 0
    %1435 = vmatpush1.bf16.msra.mxu0 0
    %1436 = vmatprep.subr.bf16.mxu0 0
    %1437 = vmatpush1.bf16.msra.mxu0 0
    %1438 = vmatprep.subr.bf16.mxu0 0
    %1439 = vmatpush1.bf16.msra.mxu0 0
    %1440 = vmatprep.subr.bf16.mxu0 0
    %1441 = vmatpush1.bf16.msra.mxu0 0
    %1442 = vmatprep.subr.bf16.mxu0 0
    %1443 = vmatpush1.bf16.msra.mxu0 0
    %1444 = vmatprep.subr.bf16.mxu0 0
    %1445 = vmatpush1.bf16.msra.mxu0 0
    %1446 = vmatprep.subr.bf16.mxu0 0
    %1447 = vmatpush1.bf16.msra.mxu0 0
    %1448 = vmatprep.mubr.bf16.mxu0 0
    %1449 = vmatmul.mubr.bf16.gmra.mrb[0].mxu0 %v1411
    %v1450 = vpop.f32.mrb[0].mxu0
    %v1451 = vadd.f32 0.0, %v1450
    %v1452 = vpop.f32.mrb[0].mxu0
    %v1453 = vpop.f32.mrb[0].mxu0
    %v1454 = vadd.f32 0.0, %v1453
    %v1455 = vpop.f32.mrb[0].mxu0
    %1456 = vmatprep.mubr.bf16.mxu0 0
    %1457 = vmatmul.mubr.bf16.gmra.mrb[0].mxu0 %v1414
    %v1458 = vpop.f32.mrb[0].mxu0
    %v1459 = vadd.f32 0.0, %v1458
    %v1460 = vpop.f32.mrb[0].mxu0
    %v1461 = vpop.f32.mrb[0].mxu0
    %v1462 = vpop.f32.mrb[0].mxu0
    %1463 = vdwg.mxu0
    %v1464 = vlaneseq
    %v1465 = vshrl.u32 %v1464, 7
    %v1466 = vsub.s32 0, %v1465
    %v1467 = vrot.slane %v1231, %v1466
    %v1468 = vadd.f32 %v1467, %v1451
    %v1469 = vadd.f32 %v1467, %v1454
    %v1470 = vadd.f32 %v1467, %v1459
    %1471 = vrot.lane.b32.xlu0 %v1232, 112
    %v1472 = vpop.permute.xlu0 %1471
    %1473 = vrot.lane.b32.xlu0 %v1233, 112
    %v1474 = vpop.permute.xlu0 %1473
    %1475 = vrot.lane.b32.xlu0 %v1232, 80
    %v1476 = vpop.permute.xlu0 %1475
    %1477 = vrot.lane.b32.xlu0 %v1233, 80
    %v1478 = vpop.permute.xlu0 %1477
    %v1480 = vsel %vm386, %v1472, 0
    %v1483 = vsel %vm386, %v1474, 0
    %v1486 = vsel %vm386, %v1476, 0
    %v1489 = vsel %vm386, %v1478, 0
    %1491 = vmatprep.subr.bf16.mxu0 0
    %1492 = vmatpush1.bf16.xpose.msra.mxu0 %v1486
    %1493 = vmatprep.subr.bf16.mxu0 0
    %1494 = vmatpush1.bf16.xpose.msra.mxu0 %v1489
    %1495 = vmatprep.subr.bf16.mxu0 0
    %1496 = vmatpush1.bf16.xpose.msra.mxu0 0
    %1497 = vmatprep.subr.bf16.mxu0 0
    %1498 = vmatpush1.bf16.xpose.msra.mxu0 0
    %1499 = vmatprep.subr.bf16.mxu0 0
    %1500 = vmatpush1.bf16.xpose.msra.mxu0 0
    %1501 = vmatprep.subr.bf16.mxu0 0
    %1502 = vmatpush1.bf16.xpose.msra.mxu0 0
    %1503 = vmatprep.subr.bf16.mxu0 0
    %1504 = vmatpush1.bf16.xpose.msra.mxu0 0
    %1505 = vmatprep.subr.bf16.mxu0 0
    %1506 = vmatpush1.bf16.xpose.msra.mxu0 0
    %1507 = vmatprep.subr.bf16.mxu0 0
    %1508 = vmatpush1.bf16.xpose.msra.mxu0 0
    %1509 = vmatprep.subr.bf16.mxu0 0
    %1510 = vmatpush1.bf16.xpose.msra.mxu0 0
    %1511 = vmatprep.subr.bf16.mxu0 0
    %1512 = vmatpush1.bf16.xpose.msra.mxu0 0
    %1513 = vmatprep.subr.bf16.mxu0 0
    %1514 = vmatpush1.bf16.xpose.msra.mxu0 0
    %1515 = vmatprep.subr.bf16.mxu0 0
    %1516 = vmatpush1.bf16.xpose.msra.mxu0 0
    %1517 = vmatprep.subr.bf16.mxu0 0
    %1518 = vmatpush1.bf16.xpose.msra.mxu0 0
    %1519 = vmatprep.subr.bf16.mxu0 0
    %1520 = vmatpush1.bf16.xpose.msra.mxu0 0
    %1521 = vmatprep.subr.bf16.mxu0 0
    %1522 = vmatpush1.bf16.xpose.msra.mxu0 0
    %1523 = vmatprep.mubr.bf16.mxu0 0
    %1524 = vmatmul.mubr.bf16.gmra.mrb[0].mxu0 %v1480
    %v1525 = vpop.f32.mrb[0].mxu0
    %v1526 = vadd.f32 %v240, %v1525
    %v1527 = vpop.f32.mrb[0].mxu0
    %v1528 = vpop.f32.mrb[0].mxu0
    %v1529 = vadd.f32 %v241, %v1528
    %v1530 = vpop.f32.mrb[0].mxu0
    %1531 = vmatprep.mubr.bf16.mxu0 0
    %1532 = vmatmul.mubr.bf16.gmra.mrb[0].mxu0 %v1483
    %v1533 = vpop.f32.mrb[0].mxu0
    %v1534 = vadd.f32 %v242, %v1533
    %v1535 = vpop.f32.mrb[0].mxu0
    %v1536 = vpop.f32.mrb[0].mxu0
    %v1537 = vpop.f32.mrb[0].mxu0
    %1538 = vdwg.mxu0
    %v1539 = vsel %vm447, %v1526, -inf
    %1540 = vmax.xlane.f32.xlu0 %v1539
    %v1541 = vpop.xlane.xlu0 %1540
    %v1542 = vsel %vm447, %v1529, -inf
    %1543 = vmax.xlane.f32.xlu0 %v1542
    %v1544 = vpop.xlane.xlu0 %1543
    %v1545 = vsel %vm447, %v1534, -inf
    %1546 = vmax.xlane.f32.xlu0 %v1545
    %v1547 = vpop.xlane.xlu0 %1546
    %v1548 = vsub.f32 %v1526, %v1541
    %v1549 = vsub.f32 %v1529, %v1544
    %v1550 = vsub.f32 %v1534, %v1547
    %v1551 = vmul.f32 %v1548, 1.442695
    %v1552 = vpow.pop %v1551
    %v1553 = vmul.f32 %v1549, 1.442695
    %v1554 = vpow.pop %v1553
    %v1555 = vmul.f32 %v1550, 1.442695
    %v1556 = vpow.pop %v1555
    %v1557 = vsel %vm447, %v1552, 0.0
    %1558 = vadd.xlane.f32.xlu0 %v1557
    %v1559 = vpop.xlane.xlu0 %1558
    %v1560 = vsel %vm447, %v1554, 0.0
    %1561 = vadd.xlane.f32.xlu0 %v1560
    %v1562 = vpop.xlane.xlu0 %1561
    %v1563 = vsel %vm447, %v1556, 0.0
    %1564 = vadd.xlane.f32.xlu0 %v1563
    %v1565 = vpop.xlane.xlu0 %1564
    %v1566 = vrcp.pop %v1559
    %v1567 = vrcp.pop %v1562
    %v1568 = vrcp.pop %v1565
    %v1569 = vmul.f32 %v1552, %v1566
    %v1570 = vmul.f32 %v1554, %v1567
    %v1571 = vmul.f32 %v1556, %v1568
    %v1572 = vpack.c.bf16 %v1570, %v1569
    %v1573 = vpack.c.bf16 %v1571, %v1571
    %1574 = vrot.lane.b32.xlu0 %v1232, 48
    %v1575 = vpop.permute.xlu0 %1574
    %1576 = vrot.lane.b32.xlu0 %v1233, 48
    %v1577 = vpop.permute.xlu0 %1576
    %v1580 = vsel %vm447, %v1572, 0
    %v1583 = vsel %vm447, %v1573, 0
    %v1586 = vsel %vm494, %v1577, 0
    %1588 = vmatprep.subr.bf16.mxu0 0
    %1589 = vmatpush1.bf16.msra.mxu0 %v1575
    %1590 = vmatprep.subr.bf16.mxu0 0
    %1591 = vmatpush1.bf16.msra.mxu0 %v1586
    %1592 = vmatprep.subr.bf16.mxu0 0
    %1593 = vmatpush1.bf16.msra.mxu0 0
    %1594 = vmatprep.subr.bf16.mxu0 0
    %1595 = vmatpush1.bf16.msra.mxu0 0
    %1596 = vmatprep.subr.bf16.mxu0 0
    %1597 = vmatpush1.bf16.msra.mxu0 0
    %1598 = vmatprep.subr.bf16.mxu0 0
    %1599 = vmatpush1.bf16.msra.mxu0 0
    %1600 = vmatprep.subr.bf16.mxu0 0
    %1601 = vmatpush1.bf16.msra.mxu0 0
    %1602 = vmatprep.subr.bf16.mxu0 0
    %1603 = vmatpush1.bf16.msra.mxu0 0
    %1604 = vmatprep.subr.bf16.mxu0 0
    %1605 = vmatpush1.bf16.msra.mxu0 0
    %1606 = vmatprep.subr.bf16.mxu0 0
    %1607 = vmatpush1.bf16.msra.mxu0 0
    %1608 = vmatprep.subr.bf16.mxu0 0
    %1609 = vmatpush1.bf16.msra.mxu0 0
    %1610 = vmatprep.subr.bf16.mxu0 0
    %1611 = vmatpush1.bf16.msra.mxu0 0
    %1612 = vmatprep.subr.bf16.mxu0 0
    %1613 = vmatpush1.bf16.msra.mxu0 0
    %1614 = vmatprep.subr.bf16.mxu0 0
    %1615 = vmatpush1.bf16.msra.mxu0 0
    %1616 = vmatprep.subr.bf16.mxu0 0
    %1617 = vmatpush1.bf16.msra.mxu0 0
    %1618 = vmatprep.subr.bf16.mxu0 0
    %1619 = vmatpush1.bf16.msra.mxu0 0
    %1620 = vmatprep.mubr.bf16.mxu0 0
    %1621 = vmatmul.mubr.bf16.gmra.mrb[0].mxu0 %v1580
    %v1622 = vpop.f32.mrb[0].mxu0
    %v1623 = vadd.f32 0.0, %v1622
    %v1624 = vpop.f32.mrb[0].mxu0
    %v1625 = vpop.f32.mrb[0].mxu0
    %v1626 = vadd.f32 0.0, %v1625
    %v1627 = vpop.f32.mrb[0].mxu0
    %1628 = vmatprep.mubr.bf16.mxu0 0
    %1629 = vmatmul.mubr.bf16.gmra.mrb[0].mxu0 %v1583
    %v1630 = vpop.f32.mrb[0].mxu0
    %v1631 = vadd.f32 0.0, %v1630
    %v1632 = vpop.f32.mrb[0].mxu0
    %v1633 = vpop.f32.mrb[0].mxu0
    %v1634 = vpop.f32.mrb[0].mxu0
    %1635 = vdwg.mxu0
    %v1636 = vpack.c.bf16 %v1626, %v1623
    %v1637 = vpack.c.bf16 %v1631, %v1631
    %v1640 = vunpack.c.l.b16 %v1400
    %v1641 = vunpack.c.l.b16 %v1401
    %v1642 = vpack.c.b16 %v1641, %v1640
    %v1645 = vsel %vm386, %v1636, 0
    %v1648 = vsel %vm386, %v1637, 0
    %1650 = vmatprep.subr.bf16.mxu0 0
    %1651 = vmatpush1.bf16.msra.mxu0 %v1642
    %1652 = vmatprep.subr.bf16.mxu0 0
    %1653 = vmatpush1.bf16.msra.mxu0 0
    %1654 = vmatprep.subr.bf16.mxu0 0
    %1655 = vmatpush1.bf16.msra.mxu0 0
    %1656 = vmatprep.subr.bf16.mxu0 0
    %1657 = vmatpush1.bf16.msra.mxu0 0
    %1658 = vmatprep.subr.bf16.mxu0 0
    %1659 = vmatpush1.bf16.msra.mxu0 0
    %1660 = vmatprep.subr.bf16.mxu0 0
    %1661 = vmatpush1.bf16.msra.mxu0 0
    %1662 = vmatprep.subr.bf16.mxu0 0
    %1663 = vmatpush1.bf16.msra.mxu0 0
    %1664 = vmatprep.subr.bf16.mxu0 0
    %1665 = vmatpush1.bf16.msra.mxu0 0
    %1666 = vmatprep.subr.bf16.mxu0 0
    %1667 = vmatpush1.bf16.msra.mxu0 0
    %1668 = vmatprep.subr.bf16.mxu0 0
    %1669 = vmatpush1.bf16.msra.mxu0 0
    %1670 = vmatprep.subr.bf16.mxu0 0
    %1671 = vmatpush1.bf16.msra.mxu0 0
    %1672 = vmatprep.subr.bf16.mxu0 0
    %1673 = vmatpush1.bf16.msra.mxu0 0
    %1674 = vmatprep.subr.bf16.mxu0 0
    %1675 = vmatpush1.bf16.msra.mxu0 0
    %1676 = vmatprep.subr.bf16.mxu0 0
    %1677 = vmatpush1.bf16.msra.mxu0 0
    %1678 = vmatprep.subr.bf16.mxu0 0
    %1679 = vmatpush1.bf16.msra.mxu0 0
    %1680 = vmatprep.subr.bf16.mxu0 0
    %1681 = vmatpush1.bf16.msra.mxu0 0
    %1682 = vmatprep.mubr.bf16.mxu0 0
    %1683 = vmatmul.mubr.bf16.gmra.mrb[0].mxu0 %v1645
    %v1684 = vpop.f32.mrb[0].mxu0
    %v1685 = vadd.f32 0.0, %v1684
    %v1686 = vpop.f32.mrb[0].mxu0
    %v1687 = vpop.f32.mrb[0].mxu0
    %v1688 = vadd.f32 0.0, %v1687
    %v1689 = vpop.f32.mrb[0].mxu0
    %1690 = vmatprep.mubr.bf16.mxu0 0
    %1691 = vmatmul.mubr.bf16.gmra.mrb[0].mxu0 %v1648
    %v1692 = vpop.f32.mrb[0].mxu0
    %v1693 = vadd.f32 0.0, %v1692
    %v1694 = vpop.f32.mrb[0].mxu0
    %v1695 = vpop.f32.mrb[0].mxu0
    %v1696 = vpop.f32.mrb[0].mxu0
    %1697 = vdwg.mxu0
    %v1698 = vadd.f32 %v1468, %v1685
    %v1699 = vadd.f32 %v1469, %v1688
    %v1700 = vadd.f32 %v1470, %v1693
    %v1701 = vadd.f32 %v1095, %v1698
    %v1702 = vadd.f32 %v1096, %v1699
    %v1703 = vadd.f32 %v1097, %v1700
    %v1704 = vld [vmem:[%s10 + $0x1] sm:$0x1]
    %v1705 = vld [vmem:[%s11 + $0x1] sm:$0x1]
    %v1706 = vsel %vm245, %v1701, 0.0
    %1707 = vadd.xlane.f32.xlu0 %v1706
    %v1708 = vpop.xlane.xlu0 %1707
    %v1709 = vsel %vm245, %v1702, 0.0
    %1710 = vadd.xlane.f32.xlu0 %v1709
    %v1711 = vpop.xlane.xlu0 %1710
    %v1712 = vsel %vm245, %v1703, 0.0
    %1713 = vadd.xlane.f32.xlu0 %v1712
    %v1714 = vpop.xlane.xlu0 %1713
    %v1715 = vmul.f32 %v1708, %v255
    %v1716 = vmul.f32 %v1711, %v255
    %v1717 = vmul.f32 %v1714, %v255
    %v1718 = vsub.f32 %v1701, %v1715
    %v1719 = vsub.f32 %v1702, %v1716
    %v1720 = vsub.f32 %v1703, %v1717
    %v1721 = vmul.f32 %v1718, %v1718
    %v1722 = vmul.f32 %v1719, %v1719
    %v1723 = vmul.f32 %v1720, %v1720
    %v1724 = vsel %vm245, %v1721, 0.0
    %1725 = vadd.xlane.f32.xlu0 %v1724
    %v1726 = vpop.xlane.xlu0 %1725
    %v1727 = vsel %vm245, %v1722, 0.0
    %1728 = vadd.xlane.f32.xlu0 %v1727
    %v1729 = vpop.xlane.xlu0 %1728
    %v1730 = vsel %vm245, %v1723, 0.0
    %1731 = vadd.xlane.f32.xlu0 %v1730
    %v1732 = vpop.xlane.xlu0 %1731
    %v1733 = vmul.f32 %v1726, %v255
    %v1734 = vmul.f32 %v1729, %v255
    %v1735 = vmul.f32 %v1732, %v255
    %v1736 = vadd.f32 %v1733, 1e-12
    %v1737 = vadd.f32 %v1734, 1e-12
    %v1738 = vadd.f32 %v1735, 1e-12
    %v1739 = vrsqrt.pop %v1736
    %v1740 = vrsqrt.pop %v1737
    %v1741 = vrsqrt.pop %v1738
    %v1742 = vmul.f32 %v1718, %v1739
    %v1743 = vmul.f32 %v1719, %v1740
    %v1744 = vmul.f32 %v1720, %v1741
    %v1745 = vlaneseq
    %v1746 = vshrl.u32 %v1745, 7
    %v1747 = vsub.s32 0, %v1746
    %v1748 = vrot.slane %v1704, %v1747
    %v1749 = vmul.f32 %v1742, %v1748
    %v1750 = vmul.f32 %v1743, %v1748
    %v1751 = vmul.f32 %v1744, %v1748
    %v1752 = vlaneseq
    %v1753 = vshrl.u32 %v1752, 7
    %v1754 = vsub.s32 0, %v1753
    %v1755 = vrot.slane %v1705, %v1754
    %v1756 = vadd.f32 %v1749, %v1755
    %v1757 = vadd.f32 %v1750, %v1755
    %v1758 = vadd.f32 %v1751, %v1755
    %s1759 = scalar_lea.vmem %s12, 16
    %v1760 = vld [vmem:[%s1759] sm:$0xf]
    %v1761 = vld [vmem:[%s1759 + $0x4] sm:$0xf]
    %v1762 = vld [vmem:[%s1759 + $0x8] sm:$0xf]
    %v1763 = vld [vmem:[%s1759 + $0xc] sm:$0xf]
    %v1764 = vpack.c.bf16 %v1757, %v1756
    %v1765 = vpack.c.bf16 %v1758, %v1758
    %v1766 = vld [vmem:[%s13 + $0x1] sm:$0x1]
    %v1767 = vlaneseq
    %v1768 = vshrl.u32 %v1767, 7
    %v1769 = vsub.s32 0, %v1768
    %v1770 = vrot.slane %v1766, %v1769
    %v1775 = vunpack.c.l.b16 %v1760
    %v1776 = vunpack.c.l.b16 %v1761
    %v1777 = vunpack.c.l.b16 %v1762
    %v1778 = vunpack.c.l.b16 %v1763
    %v1779 = vpack.c.b16 %v1776, %v1775
    %v1780 = vpack.c.b16 %v1778, %v1777
    %v1784 = vsel %vm245, %v1764, 0
    %v1787 = vsel %vm245, %v1765, 0
    %1789 = vmatprep.subr.bf16.mxu0 0
    %1790 = vmatpush1.bf16.msra.mxu0 %v1779
    %1791 = vmatprep.subr.bf16.mxu0 0
    %1792 = vmatpush1.bf16.msra.mxu0 %v1780
    %1793 = vmatprep.subr.bf16.mxu0 0
    %1794 = vmatpush1.bf16.msra.mxu0 0
    %1795 = vmatprep.subr.bf16.mxu0 0
    %1796 = vmatpush1.bf16.msra.mxu0 0
    %1797 = vmatprep.subr.bf16.mxu0 0
    %1798 = vmatpush1.bf16.msra.mxu0 0
    %1799 = vmatprep.subr.bf16.mxu0 0
    %1800 = vmatpush1.bf16.msra.mxu0 0
    %1801 = vmatprep.subr.bf16.mxu0 0
    %1802 = vmatpush1.bf16.msra.mxu0 0
    %1803 = vmatprep.subr.bf16.mxu0 0
    %1804 = vmatpush1.bf16.msra.mxu0 0
    %1805 = vmatprep.subr.bf16.mxu0 0
    %1806 = vmatpush1.bf16.msra.mxu0 0
    %1807 = vmatprep.subr.bf16.mxu0 0
    %1808 = vmatpush1.bf16.msra.mxu0 0
    %1809 = vmatprep.subr.bf16.mxu0 0
    %1810 = vmatpush1.bf16.msra.mxu0 0
    %1811 = vmatprep.subr.bf16.mxu0 0
    %1812 = vmatpush1.bf16.msra.mxu0 0
    %1813 = vmatprep.subr.bf16.mxu0 0
    %1814 = vmatpush1.bf16.msra.mxu0 0
    %1815 = vmatprep.subr.bf16.mxu0 0
    %1816 = vmatpush1.bf16.msra.mxu0 0
    %1817 = vmatprep.subr.bf16.mxu0 0
    %1818 = vmatpush1.bf16.msra.mxu0 0
    %1819 = vmatprep.subr.bf16.mxu0 0
    %1820 = vmatpush1.bf16.msra.mxu0 0
    %1821 = vmatprep.mubr.bf16.mxu0 0
    %1822 = vmatmul.mubr.bf16.gmra.mrb[0].mxu0 %v1784
    %v1823 = vpop.f32.mrb[0].mxu0
    %v1824 = vadd.f32 %v1770, %v1823
    %v1825 = vpop.f32.mrb[0].mxu0
    %v1826 = vpop.f32.mrb[0].mxu0
    %v1827 = vadd.f32 %v1770, %v1826
    %v1828 = vpop.f32.mrb[0].mxu0
    %1829 = vmatprep.mubr.bf16.mxu0 0
    %1830 = vmatmul.mubr.bf16.gmra.mrb[0].mxu0 %v1787
    %v1831 = vpop.f32.mrb[0].mxu0
    %v1832 = vadd.f32 %v1770, %v1831
    %v1833 = vpop.f32.mrb[0].mxu0
    %v1834 = vpop.f32.mrb[0].mxu0
    %v1835 = vpop.f32.mrb[0].mxu0
    %1836 = vdwg.mxu0
    %v1837 = vmul.f32 %v1824, 0.5
    %v1838 = vmul.f32 %v1827, 0.5
    %v1839 = vmul.f32 %v1832, 0.5
    %v1840 = vmul.f32 %v1824, 0.70710677
    %v1841 = vmul.f32 %v1827, 0.70710677
    %v1842 = vmul.f32 %v1832, 0.70710677
    %v1843 = verf.f32.pop %v1840
    %v1844 = verf.f32.pop %v1841
    %v1845 = verf.f32.pop %v1842
    %v1846 = vadd.f32 %v1843, 1.0
    %v1847 = vadd.f32 %v1844, 1.0
    %v1848 = vadd.f32 %v1845, 1.0
    %v1849 = vmul.f32 %v1837, %v1846
    %v1850 = vmul.f32 %v1838, %v1847
    %v1851 = vmul.f32 %v1839, %v1848
    %s1852 = scalar_lea.vmem %s14, 32
    %v1853 = vld [vmem:[%s1852] sm:$0xf]
    %v1854 = vld [vmem:[%s1852 + $0x4] sm:$0xf]
    %v1855 = vld [vmem:[%s1852 + $0x8] sm:$0xf]
    %v1856 = vld [vmem:[%s1852 + $0xc] sm:$0xf]
    %v1857 = vld [vmem:[%s1852 + $0x10] sm:$0xf]
    %v1858 = vld [vmem:[%s1852 + $0x14] sm:$0xf]
    %v1859 = vld [vmem:[%s1852 + $0x18] sm:$0xf]
    %v1860 = vld [vmem:[%s1852 + $0x1c] sm:$0xf]
    %v1861 = vpack.c.bf16 %v1850, %v1849
    %v1862 = vpack.c.bf16 %v1851, %v1851
    %v1871 = vunpack.c.l.b16 %v1853
    %v1872 = vunpack.c.l.b16 %v1854
    %v1873 = vunpack.c.l.b16 %v1855
    %v1874 = vunpack.c.l.b16 %v1856
    %v1875 = vunpack.c.l.b16 %v1857
    %v1876 = vunpack.c.l.b16 %v1858
    %v1877 = vunpack.c.l.b16 %v1859
    %v1878 = vunpack.c.l.b16 %v1860
    %v1879 = vpack.c.b16 %v1872, %v1871
    %v1880 = vpack.c.b16 %v1874, %v1873
    %v1881 = vpack.c.b16 %v1876, %v1875
    %v1882 = vpack.c.b16 %v1878, %v1877
    %v1888 = vsel %vm185, %v1861, 0
    %v1891 = vsel %vm185, %v1862, 0
    %1893 = vmatprep.subr.bf16.mxu0 0
    %1894 = vmatpush1.bf16.msra.mxu0 %v1879
    %1895 = vmatprep.subr.bf16.mxu0 0
    %1896 = vmatpush1.bf16.msra.mxu0 %v1880
    %1897 = vmatprep.subr.bf16.mxu0 0
    %1898 = vmatpush1.bf16.msra.mxu0 %v1881
    %1899 = vmatprep.subr.bf16.mxu0 0
    %1900 = vmatpush1.bf16.msra.mxu0 %v1882
    %1901 = vmatprep.subr.bf16.mxu0 0
    %1902 = vmatpush1.bf16.msra.mxu0 0
    %1903 = vmatprep.subr.bf16.mxu0 0
    %1904 = vmatpush1.bf16.msra.mxu0 0
    %1905 = vmatprep.subr.bf16.mxu0 0
    %1906 = vmatpush1.bf16.msra.mxu0 0
    %1907 = vmatprep.subr.bf16.mxu0 0
    %1908 = vmatpush1.bf16.msra.mxu0 0
    %1909 = vmatprep.subr.bf16.mxu0 0
    %1910 = vmatpush1.bf16.msra.mxu0 0
    %1911 = vmatprep.subr.bf16.mxu0 0
    %1912 = vmatpush1.bf16.msra.mxu0 0
    %1913 = vmatprep.subr.bf16.mxu0 0
    %1914 = vmatpush1.bf16.msra.mxu0 0
    %1915 = vmatprep.subr.bf16.mxu0 0
    %1916 = vmatpush1.bf16.msra.mxu0 0
    %1917 = vmatprep.subr.bf16.mxu0 0
    %1918 = vmatpush1.bf16.msra.mxu0 0
    %1919 = vmatprep.subr.bf16.mxu0 0
    %1920 = vmatpush1.bf16.msra.mxu0 0
    %1921 = vmatprep.subr.bf16.mxu0 0
    %1922 = vmatpush1.bf16.msra.mxu0 0
    %1923 = vmatprep.subr.bf16.mxu0 0
    %1924 = vmatpush1.bf16.msra.mxu0 0
    %1925 = vmatprep.mubr.bf16.mxu0 0
    %1926 = vmatmul.mubr.bf16.gmra.mrb[0].mxu0 %v1888
    %v1927 = vpop.f32.mrb[0].mxu0
    %v1928 = vadd.f32 0.0, %v1927
    %v1929 = vpop.f32.mrb[0].mxu0
    %v1930 = vpop.f32.mrb[0].mxu0
    %v1931 = vpop.f32.mrb[0].mxu0
    %1932 = vmatprep.mubr.bf16.mxu0 0
    %1933 = vmatmul.mubr.bf16.gmra.mrb[0].mxu0 %v1891
    %v1934 = vpop.f32.mrb[0].mxu0
    %v1935 = vpop.f32.mrb[0].mxu0
    %v1936 = vpop.f32.mrb[0].mxu0
    %v1937 = vpop.f32.mrb[0].mxu0
    %1938 = vdwg.mxu0
    %v1939 = vadd.f32 %v1701, %v1928
    %v1940 = vld [vmem:[%s15 + $0x1] sm:$0x1]
    %v1941 = vlaneseq
    %v1942 = vshrl.u32 %v1941, 7
    %v1943 = vsub.s32 0, %v1942
    %v1944 = vrot.slane %v1940, %v1943
    %v1945 = vadd.f32 %v1939, %v1944
    %v1946 = vld [vmem:[%s16] sm:$0x1]
    %v1947 = vld [vmem:[%s17] sm:$0x1]
    %v1948 = vsel %vm245, %v1945, 0.0
    %1949 = vadd.xlane.f32.xlu0 %v1948
    %v1950 = vpop.xlane.xlu0 %1949
    %v1951 = vmul.f32 %v1950, %v255
    %v1952 = vsub.f32 %v1945, %v1951
    %v1953 = vmul.f32 %v1952, %v1952
    %v1954 = vsel %vm245, %v1953, 0.0
    %1955 = vadd.xlane.f32.xlu0 %v1954
    %v1956 = vpop.xlane.xlu0 %1955
    %v1957 = vmul.f32 %v1956, %v255
    %v1958 = vadd.f32 %v1957, 1e-12
    %v1959 = vrsqrt.pop %v1958
    %v1960 = vmul.f32 %v1952, %v1959
    %v1962 = vlaneseq
    %v1963 = vshrl.u32 %v1962, 7
    %v1964 = vsub.s32 0, %v1963
    %v1965 = vrot.slane %v1946, %v1964
    %v1967 = vmul.f32 %v1960, %v1965
    %v1969 = vlaneseq
    %v1970 = vshrl.u32 %v1969, 7
    %v1971 = vsub.s32 0, %v1970
    %v1972 = vrot.slane %v1947, %v1971
    %v1974 = vadd.f32 %v1967, %v1972
    %v1975 = vld [vmem:[%s18] sm:$0xf]
    %v1976 = vld [vmem:[%s18 + $0x4] sm:$0xf]
    %v1977 = vld [vmem:[%s18 + $0x8] sm:$0xf]
    %v1978 = vld [vmem:[%s18 + $0xc] sm:$0xf]
    %v1979 = vpack.c.bf16 %v1974, %v1974
    %v1980 = vld [vmem:[%s19] sm:$0x1]
    %v1982 = vlaneseq
    %v1983 = vshrl.u32 %v1982, 7
    %v1984 = vsub.s32 0, %v1983
    %v1985 = vrot.slane %v1980, %v1984
    %v1991 = vunpack.c.l.b16 %v1975
    %v1992 = vunpack.c.l.b16 %v1976
    %v1993 = vunpack.c.l.b16 %v1977
    %v1994 = vunpack.c.l.b16 %v1978
    %v1995 = vpack.c.b16 %v1992, %v1991
    %v1996 = vpack.c.b16 %v1994, %v1993
    %v2000 = vsel %vm245, %v1979, 0
    %2002 = vmatprep.subr.bf16.mxu0 0
    %2003 = vmatpush1.bf16.msra.mxu0 %v1995
    %2004 = vmatprep.subr.bf16.mxu0 0
    %2005 = vmatpush1.bf16.msra.mxu0 %v1996
    %2006 = vmatprep.subr.bf16.mxu0 0
    %2007 = vmatpush1.bf16.msra.mxu0 0
    %2008 = vmatprep.subr.bf16.mxu0 0
    %2009 = vmatpush1.bf16.msra.mxu0 0
    %2010 = vmatprep.subr.bf16.mxu0 0
    %2011 = vmatpush1.bf16.msra.mxu0 0
    %2012 = vmatprep.subr.bf16.mxu0 0
    %2013 = vmatpush1.bf16.msra.mxu0 0
    %2014 = vmatprep.subr.bf16.mxu0 0
    %2015 = vmatpush1.bf16.msra.mxu0 0
    %2016 = vmatprep.subr.bf16.mxu0 0
    %2017 = vmatpush1.bf16.msra.mxu0 0
    %2018 = vmatprep.subr.bf16.mxu0 0
    %2019 = vmatpush1.bf16.msra.mxu0 0
    %2020 = vmatprep.subr.bf16.mxu0 0
    %2021 = vmatpush1.bf16.msra.mxu0 0
    %2022 = vmatprep.subr.bf16.mxu0 0
    %2023 = vmatpush1.bf16.msra.mxu0 0
    %2024 = vmatprep.subr.bf16.mxu0 0
    %2025 = vmatpush1.bf16.msra.mxu0 0
    %2026 = vmatprep.subr.bf16.mxu0 0
    %2027 = vmatpush1.bf16.msra.mxu0 0
    %2028 = vmatprep.subr.bf16.mxu0 0
    %2029 = vmatpush1.bf16.msra.mxu0 0
    %2030 = vmatprep.subr.bf16.mxu0 0
    %2031 = vmatpush1.bf16.msra.mxu0 0
    %2032 = vmatprep.subr.bf16.mxu0 0
    %2033 = vmatpush1.bf16.msra.mxu0 0
    %2034 = vmatprep.mubr.bf16.mxu0 0
    %2035 = vmatmul.mubr.bf16.gmra.mrb[0].mxu0 %v2000
    %v2036 = vpop.f32.mrb[0].mxu0
    %v2037 = vadd.f32 %v1985, %v2036
    %v2038 = vpop.f32.mrb[0].mxu0
    %v2039 = vpop.f32.mrb[0].mxu0
    %v2040 = vpop.f32.mrb[0].mxu0
    %2041 = vdwg.mxu0
    %v2042 = vtanh.pop %v2037
    %v2043 = vld [vmem:[%s20] sm:$0xf]
    %v2044 = vld [vmem:[%s20 + $0x4] sm:$0xf]
    %v2045 = vld [vmem:[%s20 + $0x8] sm:$0xf]
    %v2046 = vld [vmem:[%s20 + $0xc] sm:$0xf]
    %v2047 = vpack.c.bf16 %v2042, %v2042
    %v2048 = vld [vmem:[%s21] sm:$0xf]
    %v2049 = vld [vmem:[%s21 + $0x4] sm:$0xf]
    %v2050 = vld [vmem:[%s21 + $0x8] sm:$0xf]
    %v2051 = vld [vmem:[%s21 + $0xc] sm:$0xf]
    %v2053 = vrot.slane %v2047, 1
    %v2058 = vunpack.c.l.b16 %v2048
    %v2059 = vunpack.c.l.b16 %v2049
    %v2060 = vunpack.c.l.b16 %v2050
    %v2061 = vunpack.c.l.b16 %v2051
    %v2062 = vpack.c.b16 %v2059, %v2058
    %v2063 = vpack.c.b16 %v2061, %v2060
    %v2067 = vsel %vm245, %v2053, 0
    %2069 = vmatprep.subr.bf16.mxu0 0
    %2070 = vmatpush1.bf16.msra.mxu0 %v2062
    %2071 = vmatprep.subr.bf16.mxu0 0
    %2072 = vmatpush1.bf16.msra.mxu0 %v2063
    %2073 = vmatprep.subr.bf16.mxu0 0
    %2074 = vmatpush1.bf16.msra.mxu0 0
    %2075 = vmatprep.subr.bf16.mxu0 0
    %2076 = vmatpush1.bf16.msra.mxu0 0
    %2077 = vmatprep.subr.bf16.mxu0 0
    %2078 = vmatpush1.bf16.msra.mxu0 0
    %2079 = vmatprep.subr.bf16.mxu0 0
    %2080 = vmatpush1.bf16.msra.mxu0 0
    %2081 = vmatprep.subr.bf16.mxu0 0
    %2082 = vmatpush1.bf16.msra.mxu0 0
    %2083 = vmatprep.subr.bf16.mxu0 0
    %2084 = vmatpush1.bf16.msra.mxu0 0
    %2085 = vmatprep.subr.bf16.mxu0 0
    %2086 = vmatpush1.bf16.msra.mxu0 0
    %2087 = vmatprep.subr.bf16.mxu0 0
    %2088 = vmatpush1.bf16.msra.mxu0 0
    %2089 = vmatprep.subr.bf16.mxu0 0
    %2090 = vmatpush1.bf16.msra.mxu0 0
    %2091 = vmatprep.subr.bf16.mxu0 0
    %2092 = vmatpush1.bf16.msra.mxu0 0
    %2093 = vmatprep.subr.bf16.mxu0 0
    %2094 = vmatpush1.bf16.msra.mxu0 0
    %2095 = vmatprep.subr.bf16.mxu0 0
    %2096 = vmatpush1.bf16.msra.mxu0 0
    %2097 = vmatprep.subr.bf16.mxu0 0
    %2098 = vmatpush1.bf16.msra.mxu0 0
    %2099 = vmatprep.subr.bf16.mxu0 0
    %2100 = vmatpush1.bf16.msra.mxu0 0
    %2101 = vmatprep.mubr.bf16.mxu0 0
    %2102 = vmatmul.mubr.bf16.gmra.mrb[0].mxu0 %v2067
    %v2103 = vpop.f32.mrb[0].mxu0
    %v2104 = vadd.f32 0.0, %v2103
    %v2105 = vpop.f32.mrb[0].mxu0
    %v2106 = vpop.f32.mrb[0].mxu0
    %v2107 = vpop.f32.mrb[0].mxu0
    %2108 = vdwg.mxu0
    %v2113 = vunpack.c.l.b16 %v2043
    %v2114 = vunpack.c.l.b16 %v2044
    %v2115 = vunpack.c.l.b16 %v2045
    %v2116 = vunpack.c.l.b16 %v2046
    %v2117 = vpack.c.b16 %v2114, %v2113
    %v2118 = vpack.c.b16 %v2116, %v2115
    %v2122 = vsel %vm245, %v2047, 0
    %2124 = vmatprep.subr.bf16.mxu0 0
    %2125 = vmatpush1.bf16.msra.mxu0 %v2117
    %2126 = vmatprep.subr.bf16.mxu0 0
    %2127 = vmatpush1.bf16.msra.mxu0 %v2118
    %2128 = vmatprep.subr.bf16.mxu0 0
    %2129 = vmatpush1.bf16.msra.mxu0 0
    %2130 = vmatprep.subr.bf16.mxu0 0
    %2131 = vmatpush1.bf16.msra.mxu0 0
    %2132 = vmatprep.subr.bf16.mxu0 0
    %2133 = vmatpush1.bf16.msra.mxu0 0
    %2134 = vmatprep.subr.bf16.mxu0 0
    %2135 = vmatpush1.bf16.msra.mxu0 0
    %2136 = vmatprep.subr.bf16.mxu0 0
    %2137 = vmatpush1.bf16.msra.mxu0 0
    %2138 = vmatprep.subr.bf16.mxu0 0
    %2139 = vmatpush1.bf16.msra.mxu0 0
    %2140 = vmatprep.subr.bf16.mxu0 0
    %2141 = vmatpush1.bf16.msra.mxu0 0
    %2142 = vmatprep.subr.bf16.mxu0 0
    %2143 = vmatpush1.bf16.msra.mxu0 0
    %2144 = vmatprep.subr.bf16.mxu0 0
    %2145 = vmatpush1.bf16.msra.mxu0 0
    %2146 = vmatprep.subr.bf16.mxu0 0
    %2147 = vmatpush1.bf16.msra.mxu0 0
    %2148 = vmatprep.subr.bf16.mxu0 0
    %2149 = vmatpush1.bf16.msra.mxu0 0
    %2150 = vmatprep.subr.bf16.mxu0 0
    %2151 = vmatpush1.bf16.msra.mxu0 0
    %2152 = vmatprep.subr.bf16.mxu0 0
    %2153 = vmatpush1.bf16.msra.mxu0 0
    %2154 = vmatprep.subr.bf16.mxu0 0
    %2155 = vmatpush1.bf16.msra.mxu0 0
    %2156 = vmatprep.mubr.bf16.mxu0 0
    %2157 = vmatmul.mubr.bf16.gmra.mrb[0].mxu0 %v2122
    %v2158 = vpop.f32.mrb[0].mxu0
    %v2159 = vadd.f32 %v2104, %v2158
    %v2160 = vpop.f32.mrb[0].mxu0
    %v2161 = vpop.f32.mrb[0].mxu0
    %v2162 = vpop.f32.mrb[0].mxu0
    %2163 = vdwg.mxu0
    %v2164 = vld [vmem:[%s22] sm:$0x1]
    %v2166 = vlaneseq
    %v2167 = vshrl.u32 %v2166, 7
    %v2168 = vsub.s32 0, %v2167
    %v2169 = vrot.slane %v2164, %v2168
    %v2171 = vadd.f32 %v2159, %v2169
    %2172 = vst [vmem:[#allocation2] sm:$0x3] %v2171
    // Predicated region
    $region94: #{ssl_visual_classifier.1} parent=1 // pred_check
      _
    $region95: #{ssl_visual_classifier.1} parent=1 // pred_check_branch
      %2174 = sbr.rel (0) target = $region97
    $region96: #{ssl_visual_classifier.1} parent=1 // pred_region
      %s2176 = ssub.s32 32, 32
      %2177 = vsyncadd [#allocation3], %s2176
      %s2179 = sshll.u32 [#allocation2], 4
      %s2180 = int_to_ptr.vmem [resolvable:$true] %s2179
      %2182 = dma.vmem_to_hbm [thread:$0]  %s2180, 32, %s23, [#allocation3]
    $region97: #{ssl_visual_classifier.1} parent=1 // pred_fallthru
      _
    // Predicated region
    $region98: #{ssl_visual_classifier.1} parent=1 // pred_check
      _
    $region99: #{ssl_visual_classifier.1} parent=1 // pred_check_branch
      %2184 = sbr.rel (0) target = $region101
    $region100: #{ssl_visual_classifier.1} parent=1 // pred_region
      %2185 = dma.done [#allocation3], 32
    $region101: #{ssl_visual_classifier.1} parent=1 // pred_fallthru
      _
    %2186 = vsyncpa [#allocation3], 1

</llo_original>
